<compile_context>
chip_gen: v6e
topology: v6e:2x2x1
jax: 0.10.0
libtpu: 0.0.40
codegen_flags: <defaults>
</compile_context>

<pallas_src>
import functools

import jax
import jax.numpy as jnp
from jax import lax
from jax.experimental import pallas as pl
from jax.experimental.pallas import tpu as pltpu

LANE = 128
SUBLANE = 8


def _round_up(x, m):
    return ((x + m - 1) // m) * m


def _vmem_capacity_bytes():
    try:
        return int(pltpu.get_tpu_info().vmem_capacity_bytes)
    except Exception:
        return 64 * 1024 * 1024          # conservative (v7x per-TensorCore)


# ---------------------------------------------------------------------------
# Fused ConvBlock kernel: all (conv -> BN(eval) -> ReLU) layers for one image
# ---------------------------------------------------------------------------
def _fused_convblock_kernel(x_ref, *refs, ksize, pad_px, hh, ww, chans):
    """One grid step = one batch image through every ConvBlock layer.

    x_ref  : (1, Cin0, H*W) f32   NCHW input, spatial flattened (lane-dense).
    refs   : w_0, shift_0, ..., w_{L-1}, shift_{L-1}, o_ref, buf_a, buf_b
      w_l    : (Cout_l, k*k*Cin_pad_l) f32, BN scale folded in (resident).
      shift_l: (Cout_l, 1) f32 folded conv-bias + BN shift (resident).
      o_ref  : (1, Cout_last, H*W) f32 output block (lane-dense spatial).
      buf_a/b: (Cmax, Lbuf) f32 VMEM ping-pong feature maps in zero-padded
               "channel x flattened padded-spatial" layout.
    """
    nl = len(chans) - 1
    w_refs = [refs[2 * l] for l in range(nl)]
    s_refs = [refs[2 * l + 1] for l in range(nl)]
    o_ref = refs[2 * nl]
    buf_a = refs[2 * nl + 1]
    buf_b = refs[2 * nl + 2]

    p = pad_px
    wp = ww + 2 * p                  # padded image width
    slab = hh * wp                   # conv output slab length (incl. wrap cols)

    # Halo + tail must read as zero for every layer's shifted taps; the buffers
    # are tiny, so zero them once per grid step (keeps every step independent
    # -> megacore / "parallel" safe).
    buf_a[...] = jnp.zeros_like(buf_a)
    buf_b[...] = jnp.zeros_like(buf_b)

    # In-kernel halo fill: scatter the input rows into the zero-padded
    # (C, Hp*Wp) layout (no wrapper-side jnp.pad HBM pass).
    cin0 = chans[0]
    for y in range(hh):
        buf_a[0:cin0, pl.ds((y + p) * wp + p, ww)] = x_ref[0, :, pl.ds(y * ww, ww)]

    src, dst = buf_a, buf_b
    y_slab = None
    for l in range(nl):
        cin, cout = chans[l], chans[l + 1]
        cin_pad = _round_up(cin, SUBLANE)      # padded channels are zero / zero-weighted
        # im2col RHS: concat the k*k shifted taps along the contraction dim so
        # the whole k*k*Cin reduction happens inside one MXU matmul.
        taps = []
        for dy in range(ksize):
            for dx in range(ksize):
                taps.append(src[0:cin_pad, pl.ds(dy * wp + dx, slab)])
        rhs = jnp.concatenate(taps, axis=0)                    # (k*k*cin_pad, slab)
        acc = jnp.dot(w_refs[l][...], rhs,
                      preferred_element_type=jnp.float32)      # (cout, slab)
        y_slab = jnp.maximum(acc + s_refs[l][...], 0.0)        # BN shift + ReLU
        if l + 1 < nl:
            # Scatter only the valid W columns of each row into the next
            # layer's padded buffer; halo cells stay zero.
            for y in range(hh):
                dst[0:cout, pl.ds((y + p) * wp + p, ww)] = \
                    y_slab[:, y * wp:y * wp + ww]
            src, dst = dst, src

    # Compact the last layer's slab (drop the Wp-W wrap columns) straight into
    # the lane-dense (Cout, H*W) output block -> NCHW result, no wrapper slice.
    for y in range(hh):
        o_ref[0, :, pl.ds(y * ww, ww)] = y_slab[:, y * wp:y * wp + ww]


# ---------------------------------------------------------------------------
# ConvBlock forward wrapper
# ---------------------------------------------------------------------------
def conv_block_forward(x_nchw, folded, *, ksize, pad=True):
    """ConvBlock.forward (eval mode): stacked conv -> BN(running stats) -> ReLU."""
    if not pad:
        # TODO(synk): pad=False (valid conv) and dilation != 1 are not
        # implemented; ConvBlock defaults (pad=True, dilation=1) are supported.
        raise NotImplementedError("fused kernel only implements pad=True")

    n, cin0, hh, ww = x_nchw.shape
    chans = (cin0,) + tuple(int(f["w"].shape[0]) for f in folded)
    nl = len(folded)
    p = ksize // 2
    wp, hp = ww + 2 * p, hh + 2 * p
    hw = hh * ww
    cmax = _round_up(max(chans), SUBLANE)
    # +2p tail so the last tap's shifted read stays in bounds (reads zeros).
    lbuf = _round_up(hp * wp + 2 * p, LANE)

    # --- VMEM footprint (lane/sublane padded) vs. per-generation budget ---
    def _pad_bytes(s0, s1):
        return _round_up(s0, SUBLANE) * _round_up(s1, LANE) * 4

    need = 2 * cmax * lbuf * 4                                       # ping-pong bufs
    need += 2 * _pad_bytes(cin0, hw) + 2 * _pad_bytes(chans[-1], hw)  # dbl-buffered I/O
    for f in folded:
        need += _pad_bytes(*f["w"].shape) + _pad_bytes(*f["shift"].shape)
    cap = _vmem_capacity_bytes()
    if need > (cap * 3) // 5:
        # TODO(synk): row-tiled multi-pallas_call fallback for feature maps /
        # channel counts that do not fit resident in VMEM.
        raise NotImplementedError("feature maps too large for the fused VMEM kernel")
    vmem_limit = int(min(max(4 * need, 16 * 1024 * 1024), (cap * 3) // 4))

    flops = sum(2 * n * hw * ksize * ksize * chans[l] * chans[l + 1]
                for l in range(nl))
    bytes_accessed = (x_nchw.size + n * chans[-1] * hw) * 4 \
        + sum(int(f["w"].size) + int(f["shift"].size) for f in folded) * 4

    in_specs = [pl.BlockSpec((1, cin0, hw), lambda i: (i, 0, 0))]
    args = [x_nchw.astype(jnp.float32).reshape(n, cin0, hw)]
    for f in folded:
        in_specs.append(pl.BlockSpec(f["w"].shape, lambda i: (0, 0)))
        in_specs.append(pl.BlockSpec(f["shift"].shape, lambda i: (0, 0)))
        args += [f["w"], f["shift"]]

    kernel = functools.partial(
        _fused_convblock_kernel,
        ksize=ksize, pad_px=p, hh=hh, ww=ww, chans=chans)

    out = pl.pallas_call(
        kernel,
        out_shape=jax.ShapeDtypeStruct((n, chans[-1], hw), jnp.float32),
        grid_spec=pltpu.PrefetchScalarGridSpec(
            num_scalar_prefetch=0,
            grid=(n,),
            in_specs=in_specs,
            out_specs=pl.BlockSpec((1, chans[-1], hw), lambda i: (i, 0, 0)),
            scratch_shapes=[
                pltpu.VMEM((cmax, lbuf), jnp.float32),
                pltpu.VMEM((cmax, lbuf), jnp.float32),
            ]),
        compiler_params=pltpu.CompilerParams(
            dimension_semantics=("parallel",),
            vmem_limit_bytes=vmem_limit),
        cost_estimate=pl.CostEstimate(flops=flops, transcendentals=0,
                                      bytes_accessed=bytes_accessed),
    )(*args)

    return out.reshape(n, chans[-1], hh, ww)


# ---------------------------------------------------------------------------
# Parameter construction (PyTorch-shaped) and one-time BN folding
# ---------------------------------------------------------------------------
def make_layer_params(key, in_ch, out_ch, ksize):
    kw, kb, kg, kbeta, km, kv = jax.random.split(key, 6)
    w = jax.random.normal(kw, (out_ch, in_ch, ksize, ksize), jnp.float32) * 0.1
    b = jax.random.normal(kb, (out_ch,), jnp.float32) * 0.1
    gamma = 1.0 + 0.1 * jax.random.normal(kg, (out_ch,), jnp.float32)
    beta = 0.1 * jax.random.normal(kbeta, (out_ch,), jnp.float32)
    run_mean = 0.1 * jax.random.normal(km, (out_ch,), jnp.float32)
    run_var = jnp.abs(jax.random.normal(kv, (out_ch,), jnp.float32)) + 0.5
    return dict(w=w, b=b, gamma=gamma, beta=beta,
                run_mean=run_mean, run_var=run_var)


def fold_layer_params(params, eps=1e-5):
    """Fold conv bias + eval-mode BatchNorm into f32 weights/shift (once)."""
    # TODO(synk): training-mode BatchNorm (batch statistics + running-stat
    # updates) is not implemented; this is the eval-mode (running stats) path.
    w = params["w"]                                   # (Cout, Cin, kh, kw)
    cout, cin, kh, kw_ = w.shape
    cin_pad = _round_up(cin, SUBLANE)
    scale = params["gamma"] / jnp.sqrt(params["run_var"] + eps)
    shift = params["beta"] + (params["b"] - params["run_mean"]) * scale
    # (Cout, kh, kw, Cin) with BN scale folded (kept f32 -> no bf16 rounding);
    # pad Cin to a sublane multiple so the in-kernel tap concat is 8-aligned
    # (padded channels carry zero weight), then flatten tap-major to match the
    # kernel's RHS ordering: column = (dy*k + dx)*Cin_pad + c.
    w_t = jnp.transpose(w, (0, 2, 3, 1)) * scale[:, None, None, None]
    w_t = jnp.pad(w_t, ((0, 0), (0, 0), (0, 0), (0, cin_pad - cin)))
    w_mat = w_t.reshape(cout, kh * kw_ * cin_pad)
    return dict(w=w_mat.astype(jnp.float32),
                shift=shift.reshape(cout, 1).astype(jnp.float32))


# ---------------------------------------------------------------------------
# Pure-JAX reference (lax conv, f32, HIGHEST precision) for correctness check
# ---------------------------------------------------------------------------
def conv_block_reference(x_nchw, layer_params, ksize, pad=True, eps=1e-5):
    pad_size = ksize // 2 if pad else 0
    feat = x_nchw
    for prm in layer_params:
        y = lax.conv_general_dilated(
            feat, prm["w"], window_strides=(1, 1),
            padding=[(pad_size, pad_size), (pad_size, pad_size)],
            dimension_numbers=("NCHW", "OIHW", "NCHW"),
            precision=lax.Precision.HIGHEST)
        y = y + prm["b"][None, :, None, None]
        scale = prm["gamma"] / jnp.sqrt(prm["run_var"] + eps)
        y = (y - prm["run_mean"][None, :, None, None]) * scale[None, :, None, None]
        y = y + prm["beta"][None, :, None, None]
        feat = jnp.maximum(y, 0.0)
    return feat


if __name__ == "__main__":
    # ConvBlock(in_ch=4, unit_ch=[8, 8], ksize=3) on a (2, 4, 16, 16) input.
    batch, in_ch, H, W = 2, 4, 16, 16
    unit_ch = [8, 8]
    ksize = 3

    key = jax.random.PRNGKey(0)
    kx, kp = jax.random.split(key)
    x = jax.random.normal(kx, (batch, in_ch, H, W), jnp.float32)

    layer_params = []
    ch = in_ch
    for k, out_ch in zip(jax.random.split(kp, len(unit_ch)), unit_ch):
        layer_params.append(make_layer_params(k, ch, out_ch, ksize))
        ch = out_ch

    # Fold conv-bias + BN into the (f32) weights/shift once per weight.
    folded = [fold_layer_params(p) for p in layer_params]

    fwd = jax.jit(functools.partial(conv_block_forward, ksize=ksize, pad=True))
    out = jax.block_until_ready(fwd(x, folded))

    ref = jax.block_until_ready(
        conv_block_reference(x, layer_params, ksize, pad=True))

    assert out.shape == (batch, unit_ch[-1], H, W)
    # f32 end-to-end; tolerance only guards against MXU matmul pass precision.
    if not jnp.allclose(out, ref, atol=2e-2, rtol=2e-2):
        err = float(jnp.max(jnp.abs(out - ref)))
        raise AssertionError(f"Pallas ConvBlock mismatch (max_abs_err={err})")
    print("KERNEL_OK")
</pallas_src>

<mosaic_0001>
module attributes {stable_mosaic.version = 11 : i64} {
  func.func @_fused_convblock_kernel(%arg0: i32, %arg1: memref<1x4x256xf32, #tpu.memory_space<vmem>>, %arg2: memref<8x72xf32, #tpu.memory_space<vmem>>, %arg3: memref<8x1xf32, #tpu.memory_space<vmem>>, %arg4: memref<8x72xf32, #tpu.memory_space<vmem>>, %arg5: memref<8x1xf32, #tpu.memory_space<vmem>>, %arg6: memref<1x8x256xf32, #tpu.memory_space<vmem>>, %arg7: memref<8x384xf32, #tpu.memory_space<vmem>>, %arg8: memref<8x384xf32, #tpu.memory_space<vmem>>) attributes {dimension_semantics = [#tpu.dimension_semantics<parallel>], iteration_bounds = array<i64: 2>, scalar_prefetch = 0 : i64, scratch_operands = 2 : i64, tpu.core_type = #tpu.core_type<tc>, window_params = [{transform_indices = @transform_0, window_bounds = array<i64: 1, 4, 256>}, {pipeline_mode = #tpu.pipeline_mode<synchronous>, transform_indices = @transform_1, window_bounds = array<i64: 8, 72>}, {pipeline_mode = #tpu.pipeline_mode<synchronous>, transform_indices = @transform_2, window_bounds = array<i64: 8, 1>}, {pipeline_mode = #tpu.pipeline_mode<synchronous>, transform_indices = @transform_3, window_bounds = array<i64: 8, 72>}, {pipeline_mode = #tpu.pipeline_mode<synchronous>, transform_indices = @transform_4, window_bounds = array<i64: 8, 1>}, {transform_indices = @transform_5, window_bounds = array<i64: 1, 8, 256>}]} {
    %cst = arith.constant 0.000000e+00 : f32
    %0 = vector.broadcast %cst : f32 to vector<8x384xf32>
    %c0 = arith.constant 0 : index
    %c0_0 = arith.constant 0 : index
    %1 = vector.load %arg7[%c0, %c0_0] : memref<8x384xf32, #tpu.memory_space<vmem>>, vector<8x384xf32>
    tpu.vector_store %arg7[%c0, %c0_0], %0 {strides = array<i32>} : memref<8x384xf32, #tpu.memory_space<vmem>>, vector<8x384xf32>,
    %cst_1 = arith.constant 0.000000e+00 : f32
    %2 = vector.broadcast %cst_1 : f32 to vector<8x384xf32>
    %c0_2 = arith.constant 0 : index
    %c0_3 = arith.constant 0 : index
    %3 = vector.load %arg8[%c0_2, %c0_3] : memref<8x384xf32, #tpu.memory_space<vmem>>, vector<8x384xf32>
    tpu.vector_store %arg8[%c0_2, %c0_3], %2 {strides = array<i32>} : memref<8x384xf32, #tpu.memory_space<vmem>>, vector<8x384xf32>,
    %c0_4 = arith.constant 0 : index
    %c0_5 = arith.constant 0 : index
    %c0_6 = arith.constant 0 : index
    %4 = vector.load %arg1[%c0_4, %c0_5, %c0_6] : memref<1x4x256xf32, #tpu.memory_space<vmem>>, vector<1x4x16xf32>
    %5 = vector.shape_cast %4 : vector<1x4x16xf32> to vector<4x16xf32>
    %c0_7 = arith.constant 0 : index
    %c19 = arith.constant 19 : index
    %6 = vector.load %arg7[%c0_7, %c19] : memref<8x384xf32, #tpu.memory_space<vmem>>, vector<4x16xf32>
    tpu.vector_store %arg7[%c0_7, %c19], %5 {strides = array<i32>} : memref<8x384xf32, #tpu.memory_space<vmem>>, vector<4x16xf32>,
    %c0_8 = arith.constant 0 : index
    %c0_9 = arith.constant 0 : index
    %c16 = arith.constant 16 : index
    %7 = vector.load %arg1[%c0_8, %c0_9, %c16] : memref<1x4x256xf32, #tpu.memory_space<vmem>>, vector<1x4x16xf32>
    %8 = vector.shape_cast %7 : vector<1x4x16xf32> to vector<4x16xf32>
    %c0_10 = arith.constant 0 : index
    %c37 = arith.constant 37 : index
    %9 = vector.load %arg7[%c0_10, %c37] : memref<8x384xf32, #tpu.memory_space<vmem>>, vector<4x16xf32>
    tpu.vector_store %arg7[%c0_10, %c37], %8 {strides = array<i32>} : memref<8x384xf32, #tpu.memory_space<vmem>>, vector<4x16xf32>,
    %c0_11 = arith.constant 0 : index
    %c0_12 = arith.constant 0 : index
    %c32 = arith.constant 32 : index
    %10 = vector.load %arg1[%c0_11, %c0_12, %c32] : memref<1x4x256xf32, #tpu.memory_space<vmem>>, vector<1x4x16xf32>
    %11 = vector.shape_cast %10 : vector<1x4x16xf32> to vector<4x16xf32>
    %c0_13 = arith.constant 0 : index
    %c55 = arith.constant 55 : index
    %12 = vector.load %arg7[%c0_13, %c55] : memref<8x384xf32, #tpu.memory_space<vmem>>, vector<4x16xf32>
    tpu.vector_store %arg7[%c0_13, %c55], %11 {strides = array<i32>} : memref<8x384xf32, #tpu.memory_space<vmem>>, vector<4x16xf32>,
    %c0_14 = arith.constant 0 : index
    %c0_15 = arith.constant 0 : index
    %c48 = arith.constant 48 : index
    %13 = vector.load %arg1[%c0_14, %c0_15, %c48] : memref<1x4x256xf32, #tpu.memory_space<vmem>>, vector<1x4x16xf32>
    %14 = vector.shape_cast %13 : vector<1x4x16xf32> to vector<4x16xf32>
    %c0_16 = arith.constant 0 : index
    %c73 = arith.constant 73 : index
    %15 = vector.load %arg7[%c0_16, %c73] : memref<8x384xf32, #tpu.memory_space<vmem>>, vector<4x16xf32>
    tpu.vector_store %arg7[%c0_16, %c73], %14 {strides = array<i32>} : memref<8x384xf32, #tpu.memory_space<vmem>>, vector<4x16xf32>,
    %c0_17 = arith.constant 0 : index
    %c0_18 = arith.constant 0 : index
    %c64 = arith.constant 64 : index
    %16 = vector.load %arg1[%c0_17, %c0_18, %c64] : memref<1x4x256xf32, #tpu.memory_space<vmem>>, vector<1x4x16xf32>
    %17 = vector.shape_cast %16 : vector<1x4x16xf32> to vector<4x16xf32>
    %c0_19 = arith.constant 0 : index
    %c91 = arith.constant 91 : index
    %18 = vector.load %arg7[%c0_19, %c91] : memref<8x384xf32, #tpu.memory_space<vmem>>, vector<4x16xf32>
    tpu.vector_store %arg7[%c0_19, %c91], %17 {strides = array<i32>} : memref<8x384xf32, #tpu.memory_space<vmem>>, vector<4x16xf32>,
    %c0_20 = arith.constant 0 : index
    %c0_21 = arith.constant 0 : index
    %c80 = arith.constant 80 : index
    %19 = vector.load %arg1[%c0_20, %c0_21, %c80] : memref<1x4x256xf32, #tpu.memory_space<vmem>>, vector<1x4x16xf32>
    %20 = vector.shape_cast %19 : vector<1x4x16xf32> to vector<4x16xf32>
    %c0_22 = arith.constant 0 : index
    %c109 = arith.constant 109 : index
    %21 = vector.load %arg7[%c0_22, %c109] : memref<8x384xf32, #tpu.memory_space<vmem>>, vector<4x16xf32>
    tpu.vector_store %arg7[%c0_22, %c109], %20 {strides = array<i32>} : memref<8x384xf32, #tpu.memory_space<vmem>>, vector<4x16xf32>,
    %c0_23 = arith.constant 0 : index
    %c0_24 = arith.constant 0 : index
    %c96 = arith.constant 96 : index
    %22 = vector.load %arg1[%c0_23, %c0_24, %c96] : memref<1x4x256xf32, #tpu.memory_space<vmem>>, vector<1x4x16xf32>
    %23 = vector.shape_cast %22 : vector<1x4x16xf32> to vector<4x16xf32>
    %c0_25 = arith.constant 0 : index
    %c127 = arith.constant 127 : index
    %24 = vector.load %arg7[%c0_25, %c127] : memref<8x384xf32, #tpu.memory_space<vmem>>, vector<4x16xf32>
    tpu.vector_store %arg7[%c0_25, %c127], %23 {strides = array<i32>} : memref<8x384xf32, #tpu.memory_space<vmem>>, vector<4x16xf32>,
    %c0_26 = arith.constant 0 : index
    %c0_27 = arith.constant 0 : index
    %c112 = arith.constant 112 : index
    %25 = vector.load %arg1[%c0_26, %c0_27, %c112] : memref<1x4x256xf32, #tpu.memory_space<vmem>>, vector<1x4x16xf32>
    %26 = vector.shape_cast %25 : vector<1x4x16xf32> to vector<4x16xf32>
    %c0_28 = arith.constant 0 : index
    %c145 = arith.constant 145 : index
    %27 = vector.load %arg7[%c0_28, %c145] : memref<8x384xf32, #tpu.memory_space<vmem>>, vector<4x16xf32>
    tpu.vector_store %arg7[%c0_28, %c145], %26 {strides = array<i32>} : memref<8x384xf32, #tpu.memory_space<vmem>>, vector<4x16xf32>,
    %c0_29 = arith.constant 0 : index
    %c0_30 = arith.constant 0 : index
    %c128 = arith.constant 128 : index
    %28 = vector.load %arg1[%c0_29, %c0_30, %c128] : memref<1x4x256xf32, #tpu.memory_space<vmem>>, vector<1x4x16xf32>
    %29 = vector.shape_cast %28 : vector<1x4x16xf32> to vector<4x16xf32>
    %c0_31 = arith.constant 0 : index
    %c163 = arith.constant 163 : index
    %30 = vector.load %arg7[%c0_31, %c163] : memref<8x384xf32, #tpu.memory_space<vmem>>, vector<4x16xf32>
    tpu.vector_store %arg7[%c0_31, %c163], %29 {strides = array<i32>} : memref<8x384xf32, #tpu.memory_space<vmem>>, vector<4x16xf32>,
    %c0_32 = arith.constant 0 : index
    %c0_33 = arith.constant 0 : index
    %c144 = arith.constant 144 : index
    %31 = vector.load %arg1[%c0_32, %c0_33, %c144] : memref<1x4x256xf32, #tpu.memory_space<vmem>>, vector<1x4x16xf32>
    %32 = vector.shape_cast %31 : vector<1x4x16xf32> to vector<4x16xf32>
    %c0_34 = arith.constant 0 : index
    %c181 = arith.constant 181 : index
    %33 = vector.load %arg7[%c0_34, %c181] : memref<8x384xf32, #tpu.memory_space<vmem>>, vector<4x16xf32>
    tpu.vector_store %arg7[%c0_34, %c181], %32 {strides = array<i32>} : memref<8x384xf32, #tpu.memory_space<vmem>>, vector<4x16xf32>,
    %c0_35 = arith.constant 0 : index
    %c0_36 = arith.constant 0 : index
    %c160 = arith.constant 160 : index
    %34 = vector.load %arg1[%c0_35, %c0_36, %c160] : memref<1x4x256xf32, #tpu.memory_space<vmem>>, vector<1x4x16xf32>
    %35 = vector.shape_cast %34 : vector<1x4x16xf32> to vector<4x16xf32>
    %c0_37 = arith.constant 0 : index
    %c199 = arith.constant 199 : index
    %36 = vector.load %arg7[%c0_37, %c199] : memref<8x384xf32, #tpu.memory_space<vmem>>, vector<4x16xf32>
    tpu.vector_store %arg7[%c0_37, %c199], %35 {strides = array<i32>} : memref<8x384xf32, #tpu.memory_space<vmem>>, vector<4x16xf32>,
    %c0_38 = arith.constant 0 : index
    %c0_39 = arith.constant 0 : index
    %c176 = arith.constant 176 : index
    %37 = vector.load %arg1[%c0_38, %c0_39, %c176] : memref<1x4x256xf32, #tpu.memory_space<vmem>>, vector<1x4x16xf32>
    %38 = vector.shape_cast %37 : vector<1x4x16xf32> to vector<4x16xf32>
    %c0_40 = arith.constant 0 : index
    %c217 = arith.constant 217 : index
    %39 = vector.load %arg7[%c0_40, %c217] : memref<8x384xf32, #tpu.memory_space<vmem>>, vector<4x16xf32>
    tpu.vector_store %arg7[%c0_40, %c217], %38 {strides = array<i32>} : memref<8x384xf32, #tpu.memory_space<vmem>>, vector<4x16xf32>,
    %c0_41 = arith.constant 0 : index
    %c0_42 = arith.constant 0 : index
    %c192 = arith.constant 192 : index
    %40 = vector.load %arg1[%c0_41, %c0_42, %c192] : memref<1x4x256xf32, #tpu.memory_space<vmem>>, vector<1x4x16xf32>
    %41 = vector.shape_cast %40 : vector<1x4x16xf32> to vector<4x16xf32>
    %c0_43 = arith.constant 0 : index
    %c235 = arith.constant 235 : index
    %42 = vector.load %arg7[%c0_43, %c235] : memref<8x384xf32, #tpu.memory_space<vmem>>, vector<4x16xf32>
    tpu.vector_store %arg7[%c0_43, %c235], %41 {strides = array<i32>} : memref<8x384xf32, #tpu.memory_space<vmem>>, vector<4x16xf32>,
    %c0_44 = arith.constant 0 : index
    %c0_45 = arith.constant 0 : index
    %c208 = arith.constant 208 : index
    %43 = vector.load %arg1[%c0_44, %c0_45, %c208] : memref<1x4x256xf32, #tpu.memory_space<vmem>>, vector<1x4x16xf32>
    %44 = vector.shape_cast %43 : vector<1x4x16xf32> to vector<4x16xf32>
    %c0_46 = arith.constant 0 : index
    %c253 = arith.constant 253 : index
    %45 = vector.load %arg7[%c0_46, %c253] : memref<8x384xf32, #tpu.memory_space<vmem>>, vector<4x16xf32>
    tpu.vector_store %arg7[%c0_46, %c253], %44 {strides = array<i32>} : memref<8x384xf32, #tpu.memory_space<vmem>>, vector<4x16xf32>,
    %c0_47 = arith.constant 0 : index
    %c0_48 = arith.constant 0 : index
    %c224 = arith.constant 224 : index
    %46 = vector.load %arg1[%c0_47, %c0_48, %c224] : memref<1x4x256xf32, #tpu.memory_space<vmem>>, vector<1x4x16xf32>
    %47 = vector.shape_cast %46 : vector<1x4x16xf32> to vector<4x16xf32>
    %c0_49 = arith.constant 0 : index
    %c271 = arith.constant 271 : index
    %48 = vector.load %arg7[%c0_49, %c271] : memref<8x384xf32, #tpu.memory_space<vmem>>, vector<4x16xf32>
    tpu.vector_store %arg7[%c0_49, %c271], %47 {strides = array<i32>} : memref<8x384xf32, #tpu.memory_space<vmem>>, vector<4x16xf32>,
    %c0_50 = arith.constant 0 : index
    %c0_51 = arith.constant 0 : index
    %c240 = arith.constant 240 : index
    %49 = vector.load %arg1[%c0_50, %c0_51, %c240] : memref<1x4x256xf32, #tpu.memory_space<vmem>>, vector<1x4x16xf32>
    %50 = vector.shape_cast %49 : vector<1x4x16xf32> to vector<4x16xf32>
    %c0_52 = arith.constant 0 : index
    %c289 = arith.constant 289 : index
    %51 = vector.load %arg7[%c0_52, %c289] : memref<8x384xf32, #tpu.memory_space<vmem>>, vector<4x16xf32>
    tpu.vector_store %arg7[%c0_52, %c289], %50 {strides = array<i32>} : memref<8x384xf32, #tpu.memory_space<vmem>>, vector<4x16xf32>,
    %c0_53 = arith.constant 0 : index
    %c0_54 = arith.constant 0 : index
    %52 = vector.load %arg7[%c0_53, %c0_54] : memref<8x384xf32, #tpu.memory_space<vmem>>, vector<8x288xf32>
    %c0_55 = arith.constant 0 : index
    %c1 = arith.constant 1 : index
    %53 = vector.load %arg7[%c0_55, %c1] : memref<8x384xf32, #tpu.memory_space<vmem>>, vector<8x288xf32>
    %c0_56 = arith.constant 0 : index
    %c2 = arith.constant 2 : index
    %54 = vector.load %arg7[%c0_56, %c2] : memref<8x384xf32, #tpu.memory_space<vmem>>, vector<8x288xf32>
    %c0_57 = arith.constant 0 : index
    %c18 = arith.constant 18 : index
    %55 = vector.load %arg7[%c0_57, %c18] : memref<8x384xf32, #tpu.memory_space<vmem>>, vector<8x288xf32>
    %c0_58 = arith.constant 0 : index
    %c19_59 = arith.constant 19 : index
    %56 = vector.load %arg7[%c0_58, %c19_59] : memref<8x384xf32, #tpu.memory_space<vmem>>, vector<8x288xf32>
    %c0_60 = arith.constant 0 : index
    %c20 = arith.constant 20 : index
    %57 = vector.load %arg7[%c0_60, %c20] : memref<8x384xf32, #tpu.memory_space<vmem>>, vector<8x288xf32>
    %c0_61 = arith.constant 0 : index
    %c36 = arith.constant 36 : index
    %58 = vector.load %arg7[%c0_61, %c36] : memref<8x384xf32, #tpu.memory_space<vmem>>, vector<8x288xf32>
    %c0_62 = arith.constant 0 : index
    %c37_63 = arith.constant 37 : index
    %59 = vector.load %arg7[%c0_62, %c37_63] : memref<8x384xf32, #tpu.memory_space<vmem>>, vector<8x288xf32>
    %c0_64 = arith.constant 0 : index
    %c38 = arith.constant 38 : index
    %60 = vector.load %arg7[%c0_64, %c38] : memref<8x384xf32, #tpu.memory_space<vmem>>, vector<8x288xf32>
    %61 = tpu.concatenate %52, %53, %54, %55, %56, %57, %58, %59, %60 in 0 : vector<8x288xf32>, vector<8x288xf32>, vector<8x288xf32>, vector<8x288xf32>, vector<8x288xf32>, vector<8x288xf32>, vector<8x288xf32>, vector<8x288xf32>, vector<8x288xf32> -> vector<72x288xf32>
    %c0_65 = arith.constant 0 : index
    %c0_66 = arith.constant 0 : index
    %62 = vector.load %arg2[%c0_65, %c0_66] : memref<8x72xf32, #tpu.memory_space<vmem>>, vector<8x72xf32>
    %cst_67 = arith.constant dense<0.000000e+00> : vector<8x288xf32>
    %63 = tpu.matmul %62, %61, %cst_67 {dimension_numbers = #tpu.dot_dimension_numbers<[1], [0], [0], [1], [0, 0, 1, 1], [], []>} : vector<8x72xf32>, vector<72x288xf32>, vector<8x288xf32> -> vector<8x288xf32>
    %c0_68 = arith.constant 0 : index
    %c0_69 = arith.constant 0 : index
    %64 = vector.load %arg3[%c0_68, %c0_69] : memref<8x1xf32, #tpu.memory_space<vmem>>, vector<8x1xf32>
    %65 = vector.broadcast %64 : vector<8x1xf32> to vector<8x288xf32>
    %66 = arith.addf %63, %65 : vector<8x288xf32>
    %cst_70 = arith.constant 0.000000e+00 : f32
    %67 = vector.broadcast %cst_70 : f32 to vector<8x288xf32>
    %68 = arith.maximumf %66, %67 : vector<8x288xf32>
    %69 = vector.extract_strided_slice %68 {offsets = [0, 0], sizes = [8, 16], strides = [1, 1]} : vector<8x288xf32> to vector<8x16xf32>
    %c0_71 = arith.constant 0 : index
    %c19_72 = arith.constant 19 : index
    %70 = vector.load %arg8[%c0_71, %c19_72] : memref<8x384xf32, #tpu.memory_space<vmem>>, vector<8x16xf32>
    tpu.vector_store %arg8[%c0_71, %c19_72], %69 {strides = array<i32>} : memref<8x384xf32, #tpu.memory_space<vmem>>, vector<8x16xf32>,
    %71 = vector.extract_strided_slice %68 {offsets = [0, 18], sizes = [8, 16], strides = [1, 1]} : vector<8x288xf32> to vector<8x16xf32>
    %c0_73 = arith.constant 0 : index
    %c37_74 = arith.constant 37 : index
    %72 = vector.load %arg8[%c0_73, %c37_74] : memref<8x384xf32, #tpu.memory_space<vmem>>, vector<8x16xf32>
    tpu.vector_store %arg8[%c0_73, %c37_74], %71 {strides = array<i32>} : memref<8x384xf32, #tpu.memory_space<vmem>>, vector<8x16xf32>,
    %73 = vector.extract_strided_slice %68 {offsets = [0, 36], sizes = [8, 16], strides = [1, 1]} : vector<8x288xf32> to vector<8x16xf32>
    %c0_75 = arith.constant 0 : index
    %c55_76 = arith.constant 55 : index
    %74 = vector.load %arg8[%c0_75, %c55_76] : memref<8x384xf32, #tpu.memory_space<vmem>>, vector<8x16xf32>
    tpu.vector_store %arg8[%c0_75, %c55_76], %73 {strides = array<i32>} : memref<8x384xf32, #tpu.memory_space<vmem>>, vector<8x16xf32>,
    %75 = vector.extract_strided_slice %68 {offsets = [0, 54], sizes = [8, 16], strides = [1, 1]} : vector<8x288xf32> to vector<8x16xf32>
    %c0_77 = arith.constant 0 : index
    %c73_78 = arith.constant 73 : index
    %76 = vector.load %arg8[%c0_77, %c73_78] : memref<8x384xf32, #tpu.memory_space<vmem>>, vector<8x16xf32>
    tpu.vector_store %arg8[%c0_77, %c73_78], %75 {strides = array<i32>} : memref<8x384xf32, #tpu.memory_space<vmem>>, vector<8x16xf32>,
    %77 = vector.extract_strided_slice %68 {offsets = [0, 72], sizes = [8, 16], strides = [1, 1]} : vector<8x288xf32> to vector<8x16xf32>
    %c0_79 = arith.constant 0 : index
    %c91_80 = arith.constant 91 : index
    %78 = vector.load %arg8[%c0_79, %c91_80] : memref<8x384xf32, #tpu.memory_space<vmem>>, vector<8x16xf32>
    tpu.vector_store %arg8[%c0_79, %c91_80], %77 {strides = array<i32>} : memref<8x384xf32, #tpu.memory_space<vmem>>, vector<8x16xf32>,
    %79 = vector.extract_strided_slice %68 {offsets = [0, 90], sizes = [8, 16], strides = [1, 1]} : vector<8x288xf32> to vector<8x16xf32>
    %c0_81 = arith.constant 0 : index
    %c109_82 = arith.constant 109 : index
    %80 = vector.load %arg8[%c0_81, %c109_82] : memref<8x384xf32, #tpu.memory_space<vmem>>, vector<8x16xf32>
    tpu.vector_store %arg8[%c0_81, %c109_82], %79 {strides = array<i32>} : memref<8x384xf32, #tpu.memory_space<vmem>>, vector<8x16xf32>,
    %81 = vector.extract_strided_slice %68 {offsets = [0, 108], sizes = [8, 16], strides = [1, 1]} : vector<8x288xf32> to vector<8x16xf32>
    %c0_83 = arith.constant 0 : index
    %c127_84 = arith.constant 127 : index
    %82 = vector.load %arg8[%c0_83, %c127_84] : memref<8x384xf32, #tpu.memory_space<vmem>>, vector<8x16xf32>
    tpu.vector_store %arg8[%c0_83, %c127_84], %81 {strides = array<i32>} : memref<8x384xf32, #tpu.memory_space<vmem>>, vector<8x16xf32>,
    %83 = vector.extract_strided_slice %68 {offsets = [0, 126], sizes = [8, 16], strides = [1, 1]} : vector<8x288xf32> to vector<8x16xf32>
    %c0_85 = arith.constant 0 : index
    %c145_86 = arith.constant 145 : index
    %84 = vector.load %arg8[%c0_85, %c145_86] : memref<8x384xf32, #tpu.memory_space<vmem>>, vector<8x16xf32>
    tpu.vector_store %arg8[%c0_85, %c145_86], %83 {strides = array<i32>} : memref<8x384xf32, #tpu.memory_space<vmem>>, vector<8x16xf32>,
    %85 = vector.extract_strided_slice %68 {offsets = [0, 144], sizes = [8, 16], strides = [1, 1]} : vector<8x288xf32> to vector<8x16xf32>
    %c0_87 = arith.constant 0 : index
    %c163_88 = arith.constant 163 : index
    %86 = vector.load %arg8[%c0_87, %c163_88] : memref<8x384xf32, #tpu.memory_space<vmem>>, vector<8x16xf32>
    tpu.vector_store %arg8[%c0_87, %c163_88], %85 {strides = array<i32>} : memref<8x384xf32, #tpu.memory_space<vmem>>, vector<8x16xf32>,
    %87 = vector.extract_strided_slice %68 {offsets = [0, 162], sizes = [8, 16], strides = [1, 1]} : vector<8x288xf32> to vector<8x16xf32>
    %c0_89 = arith.constant 0 : index
    %c181_90 = arith.constant 181 : index
    %88 = vector.load %arg8[%c0_89, %c181_90] : memref<8x384xf32, #tpu.memory_space<vmem>>, vector<8x16xf32>
    tpu.vector_store %arg8[%c0_89, %c181_90], %87 {strides = array<i32>} : memref<8x384xf32, #tpu.memory_space<vmem>>, vector<8x16xf32>,
    %89 = vector.extract_strided_slice %68 {offsets = [0, 180], sizes = [8, 16], strides = [1, 1]} : vector<8x288xf32> to vector<8x16xf32>
    %c0_91 = arith.constant 0 : index
    %c199_92 = arith.constant 199 : index
    %90 = vector.load %arg8[%c0_91, %c199_92] : memref<8x384xf32, #tpu.memory_space<vmem>>, vector<8x16xf32>
    tpu.vector_store %arg8[%c0_91, %c199_92], %89 {strides = array<i32>} : memref<8x384xf32, #tpu.memory_space<vmem>>, vector<8x16xf32>,
    %91 = vector.extract_strided_slice %68 {offsets = [0, 198], sizes = [8, 16], strides = [1, 1]} : vector<8x288xf32> to vector<8x16xf32>
    %c0_93 = arith.constant 0 : index
    %c217_94 = arith.constant 217 : index
    %92 = vector.load %arg8[%c0_93, %c217_94] : memref<8x384xf32, #tpu.memory_space<vmem>>, vector<8x16xf32>
    tpu.vector_store %arg8[%c0_93, %c217_94], %91 {strides = array<i32>} : memref<8x384xf32, #tpu.memory_space<vmem>>, vector<8x16xf32>,
    %93 = vector.extract_strided_slice %68 {offsets = [0, 216], sizes = [8, 16], strides = [1, 1]} : vector<8x288xf32> to vector<8x16xf32>
    %c0_95 = arith.constant 0 : index
    %c235_96 = arith.constant 235 : index
    %94 = vector.load %arg8[%c0_95, %c235_96] : memref<8x384xf32, #tpu.memory_space<vmem>>, vector<8x16xf32>
    tpu.vector_store %arg8[%c0_95, %c235_96], %93 {strides = array<i32>} : memref<8x384xf32, #tpu.memory_space<vmem>>, vector<8x16xf32>,
    %95 = vector.extract_strided_slice %68 {offsets = [0, 234], sizes = [8, 16], strides = [1, 1]} : vector<8x288xf32> to vector<8x16xf32>
    %c0_97 = arith.constant 0 : index
    %c253_98 = arith.constant 253 : index
    %96 = vector.load %arg8[%c0_97, %c253_98] : memref<8x384xf32, #tpu.memory_space<vmem>>, vector<8x16xf32>
    tpu.vector_store %arg8[%c0_97, %c253_98], %95 {strides = array<i32>} : memref<8x384xf32, #tpu.memory_space<vmem>>, vector<8x16xf32>,
    %97 = vector.extract_strided_slice %68 {offsets = [0, 252], sizes = [8, 16], strides = [1, 1]} : vector<8x288xf32> to vector<8x16xf32>
    %c0_99 = arith.constant 0 : index
    %c271_100 = arith.constant 271 : index
    %98 = vector.load %arg8[%c0_99, %c271_100] : memref<8x384xf32, #tpu.memory_space<vmem>>, vector<8x16xf32>
    tpu.vector_store %arg8[%c0_99, %c271_100], %97 {strides = array<i32>} : memref<8x384xf32, #tpu.memory_space<vmem>>, vector<8x16xf32>,
    %99 = vector.extract_strided_slice %68 {offsets = [0, 270], sizes = [8, 16], strides = [1, 1]} : vector<8x288xf32> to vector<8x16xf32>
    %c0_101 = arith.constant 0 : index
    %c289_102 = arith.constant 289 : index
    %100 = vector.load %arg8[%c0_101, %c289_102] : memref<8x384xf32, #tpu.memory_space<vmem>>, vector<8x16xf32>
    tpu.vector_store %arg8[%c0_101, %c289_102], %99 {strides = array<i32>} : memref<8x384xf32, #tpu.memory_space<vmem>>, vector<8x16xf32>,
    %c0_103 = arith.constant 0 : index
    %c0_104 = arith.constant 0 : index
    %101 = vector.load %arg8[%c0_103, %c0_104] : memref<8x384xf32, #tpu.memory_space<vmem>>, vector<8x288xf32>
    %c0_105 = arith.constant 0 : index
    %c1_106 = arith.constant 1 : index
    %102 = vector.load %arg8[%c0_105, %c1_106] : memref<8x384xf32, #tpu.memory_space<vmem>>, vector<8x288xf32>
    %c0_107 = arith.constant 0 : index
    %c2_108 = arith.constant 2 : index
    %103 = vector.load %arg8[%c0_107, %c2_108] : memref<8x384xf32, #tpu.memory_space<vmem>>, vector<8x288xf32>
    %c0_109 = arith.constant 0 : index
    %c18_110 = arith.constant 18 : index
    %104 = vector.load %arg8[%c0_109, %c18_110] : memref<8x384xf32, #tpu.memory_space<vmem>>, vector<8x288xf32>
    %c0_111 = arith.constant 0 : index
    %c19_112 = arith.constant 19 : index
    %105 = vector.load %arg8[%c0_111, %c19_112] : memref<8x384xf32, #tpu.memory_space<vmem>>, vector<8x288xf32>
    %c0_113 = arith.constant 0 : index
    %c20_114 = arith.constant 20 : index
    %106 = vector.load %arg8[%c0_113, %c20_114] : memref<8x384xf32, #tpu.memory_space<vmem>>, vector<8x288xf32>
    %c0_115 = arith.constant 0 : index
    %c36_116 = arith.constant 36 : index
    %107 = vector.load %arg8[%c0_115, %c36_116] : memref<8x384xf32, #tpu.memory_space<vmem>>, vector<8x288xf32>
    %c0_117 = arith.constant 0 : index
    %c37_118 = arith.constant 37 : index
    %108 = vector.load %arg8[%c0_117, %c37_118] : memref<8x384xf32, #tpu.memory_space<vmem>>, vector<8x288xf32>
    %c0_119 = arith.constant 0 : index
    %c38_120 = arith.constant 38 : index
    %109 = vector.load %arg8[%c0_119, %c38_120] : memref<8x384xf32, #tpu.memory_space<vmem>>, vector<8x288xf32>
    %110 = tpu.concatenate %101, %102, %103, %104, %105, %106, %107, %108, %109 in 0 : vector<8x288xf32>, vector<8x288xf32>, vector<8x288xf32>, vector<8x288xf32>, vector<8x288xf32>, vector<8x288xf32>, vector<8x288xf32>, vector<8x288xf32>, vector<8x288xf32> -> vector<72x288xf32>
    %c0_121 = arith.constant 0 : index
    %c0_122 = arith.constant 0 : index
    %111 = vector.load %arg4[%c0_121, %c0_122] : memref<8x72xf32, #tpu.memory_space<vmem>>, vector<8x72xf32>
    %cst_123 = arith.constant dense<0.000000e+00> : vector<8x288xf32>
    %112 = tpu.matmul %111, %110, %cst_123 {dimension_numbers = #tpu.dot_dimension_numbers<[1], [0], [0], [1], [0, 0, 1, 1], [], []>} : vector<8x72xf32>, vector<72x288xf32>, vector<8x288xf32> -> vector<8x288xf32>
    %c0_124 = arith.constant 0 : index
    %c0_125 = arith.constant 0 : index
    %113 = vector.load %arg5[%c0_124, %c0_125] : memref<8x1xf32, #tpu.memory_space<vmem>>, vector<8x1xf32>
    %114 = vector.broadcast %113 : vector<8x1xf32> to vector<8x288xf32>
    %115 = arith.addf %112, %114 : vector<8x288xf32>
    %cst_126 = arith.constant 0.000000e+00 : f32
    %116 = vector.broadcast %cst_126 : f32 to vector<8x288xf32>
    %117 = arith.maximumf %115, %116 : vector<8x288xf32>
    %118 = vector.extract_strided_slice %117 {offsets = [0, 0], sizes = [8, 16], strides = [1, 1]} : vector<8x288xf32> to vector<8x16xf32>
    %c0_127 = arith.constant 0 : index
    %c0_128 = arith.constant 0 : index
    %c0_129 = arith.constant 0 : index
    %119 = vector.load %arg6[%c0_127, %c0_128, %c0_129] : memref<1x8x256xf32, #tpu.memory_space<vmem>>, vector<1x8x16xf32>
    %120 = vector.shape_cast %119 : vector<1x8x16xf32> to vector<8x16xf32>
    %121 = vector.shape_cast %118 : vector<8x16xf32> to vector<1x8x16xf32>
    tpu.vector_store %arg6[%c0_127, %c0_128, %c0_129], %121 {strides = array<i32>} : memref<1x8x256xf32, #tpu.memory_space<vmem>>, vector<1x8x16xf32>,
    %122 = vector.extract_strided_slice %117 {offsets = [0, 18], sizes = [8, 16], strides = [1, 1]} : vector<8x288xf32> to vector<8x16xf32>
    %c0_130 = arith.constant 0 : index
    %c0_131 = arith.constant 0 : index
    %c16_132 = arith.constant 16 : index
    %123 = vector.load %arg6[%c0_130, %c0_131, %c16_132] : memref<1x8x256xf32, #tpu.memory_space<vmem>>, vector<1x8x16xf32>
    %124 = vector.shape_cast %123 : vector<1x8x16xf32> to vector<8x16xf32>
    %125 = vector.shape_cast %122 : vector<8x16xf32> to vector<1x8x16xf32>
    tpu.vector_store %arg6[%c0_130, %c0_131, %c16_132], %125 {strides = array<i32>} : memref<1x8x256xf32, #tpu.memory_space<vmem>>, vector<1x8x16xf32>,
    %126 = vector.extract_strided_slice %117 {offsets = [0, 36], sizes = [8, 16], strides = [1, 1]} : vector<8x288xf32> to vector<8x16xf32>
    %c0_133 = arith.constant 0 : index
    %c0_134 = arith.constant 0 : index
    %c32_135 = arith.constant 32 : index
    %127 = vector.load %arg6[%c0_133, %c0_134, %c32_135] : memref<1x8x256xf32, #tpu.memory_space<vmem>>, vector<1x8x16xf32>
    %128 = vector.shape_cast %127 : vector<1x8x16xf32> to vector<8x16xf32>
    %129 = vector.shape_cast %126 : vector<8x16xf32> to vector<1x8x16xf32>
    tpu.vector_store %arg6[%c0_133, %c0_134, %c32_135], %129 {strides = array<i32>} : memref<1x8x256xf32, #tpu.memory_space<vmem>>, vector<1x8x16xf32>,
    %130 = vector.extract_strided_slice %117 {offsets = [0, 54], sizes = [8, 16], strides = [1, 1]} : vector<8x288xf32> to vector<8x16xf32>
    %c0_136 = arith.constant 0 : index
    %c0_137 = arith.constant 0 : index
    %c48_138 = arith.constant 48 : index
    %131 = vector.load %arg6[%c0_136, %c0_137, %c48_138] : memref<1x8x256xf32, #tpu.memory_space<vmem>>, vector<1x8x16xf32>
    %132 = vector.shape_cast %131 : vector<1x8x16xf32> to vector<8x16xf32>
    %133 = vector.shape_cast %130 : vector<8x16xf32> to vector<1x8x16xf32>
    tpu.vector_store %arg6[%c0_136, %c0_137, %c48_138], %133 {strides = array<i32>} : memref<1x8x256xf32, #tpu.memory_space<vmem>>, vector<1x8x16xf32>,
    %134 = vector.extract_strided_slice %117 {offsets = [0, 72], sizes = [8, 16], strides = [1, 1]} : vector<8x288xf32> to vector<8x16xf32>
    %c0_139 = arith.constant 0 : index
    %c0_140 = arith.constant 0 : index
    %c64_141 = arith.constant 64 : index
    %135 = vector.load %arg6[%c0_139, %c0_140, %c64_141] : memref<1x8x256xf32, #tpu.memory_space<vmem>>, vector<1x8x16xf32>
    %136 = vector.shape_cast %135 : vector<1x8x16xf32> to vector<8x16xf32>
    %137 = vector.shape_cast %134 : vector<8x16xf32> to vector<1x8x16xf32>
    tpu.vector_store %arg6[%c0_139, %c0_140, %c64_141], %137 {strides = array<i32>} : memref<1x8x256xf32, #tpu.memory_space<vmem>>, vector<1x8x16xf32>,
    %138 = vector.extract_strided_slice %117 {offsets = [0, 90], sizes = [8, 16], strides = [1, 1]} : vector<8x288xf32> to vector<8x16xf32>
    %c0_142 = arith.constant 0 : index
    %c0_143 = arith.constant 0 : index
    %c80_144 = arith.constant 80 : index
    %139 = vector.load %arg6[%c0_142, %c0_143, %c80_144] : memref<1x8x256xf32, #tpu.memory_space<vmem>>, vector<1x8x16xf32>
    %140 = vector.shape_cast %139 : vector<1x8x16xf32> to vector<8x16xf32>
    %141 = vector.shape_cast %138 : vector<8x16xf32> to vector<1x8x16xf32>
    tpu.vector_store %arg6[%c0_142, %c0_143, %c80_144], %141 {strides = array<i32>} : memref<1x8x256xf32, #tpu.memory_space<vmem>>, vector<1x8x16xf32>,
    %142 = vector.extract_strided_slice %117 {offsets = [0, 108], sizes = [8, 16], strides = [1, 1]} : vector<8x288xf32> to vector<8x16xf32>
    %c0_145 = arith.constant 0 : index
    %c0_146 = arith.constant 0 : index
    %c96_147 = arith.constant 96 : index
    %143 = vector.load %arg6[%c0_145, %c0_146, %c96_147] : memref<1x8x256xf32, #tpu.memory_space<vmem>>, vector<1x8x16xf32>
    %144 = vector.shape_cast %143 : vector<1x8x16xf32> to vector<8x16xf32>
    %145 = vector.shape_cast %142 : vector<8x16xf32> to vector<1x8x16xf32>
    tpu.vector_store %arg6[%c0_145, %c0_146, %c96_147], %145 {strides = array<i32>} : memref<1x8x256xf32, #tpu.memory_space<vmem>>, vector<1x8x16xf32>,
    %146 = vector.extract_strided_slice %117 {offsets = [0, 126], sizes = [8, 16], strides = [1, 1]} : vector<8x288xf32> to vector<8x16xf32>
    %c0_148 = arith.constant 0 : index
    %c0_149 = arith.constant 0 : index
    %c112_150 = arith.constant 112 : index
    %147 = vector.load %arg6[%c0_148, %c0_149, %c112_150] : memref<1x8x256xf32, #tpu.memory_space<vmem>>, vector<1x8x16xf32>
    %148 = vector.shape_cast %147 : vector<1x8x16xf32> to vector<8x16xf32>
    %149 = vector.shape_cast %146 : vector<8x16xf32> to vector<1x8x16xf32>
    tpu.vector_store %arg6[%c0_148, %c0_149, %c112_150], %149 {strides = array<i32>} : memref<1x8x256xf32, #tpu.memory_space<vmem>>, vector<1x8x16xf32>,
    %150 = vector.extract_strided_slice %117 {offsets = [0, 144], sizes = [8, 16], strides = [1, 1]} : vector<8x288xf32> to vector<8x16xf32>
    %c0_151 = arith.constant 0 : index
    %c0_152 = arith.constant 0 : index
    %c128_153 = arith.constant 128 : index
    %151 = vector.load %arg6[%c0_151, %c0_152, %c128_153] : memref<1x8x256xf32, #tpu.memory_space<vmem>>, vector<1x8x16xf32>
    %152 = vector.shape_cast %151 : vector<1x8x16xf32> to vector<8x16xf32>
    %153 = vector.shape_cast %150 : vector<8x16xf32> to vector<1x8x16xf32>
    tpu.vector_store %arg6[%c0_151, %c0_152, %c128_153], %153 {strides = array<i32>} : memref<1x8x256xf32, #tpu.memory_space<vmem>>, vector<1x8x16xf32>,
    %154 = vector.extract_strided_slice %117 {offsets = [0, 162], sizes = [8, 16], strides = [1, 1]} : vector<8x288xf32> to vector<8x16xf32>
    %c0_154 = arith.constant 0 : index
    %c0_155 = arith.constant 0 : index
    %c144_156 = arith.constant 144 : index
    %155 = vector.load %arg6[%c0_154, %c0_155, %c144_156] : memref<1x8x256xf32, #tpu.memory_space<vmem>>, vector<1x8x16xf32>
    %156 = vector.shape_cast %155 : vector<1x8x16xf32> to vector<8x16xf32>
    %157 = vector.shape_cast %154 : vector<8x16xf32> to vector<1x8x16xf32>
    tpu.vector_store %arg6[%c0_154, %c0_155, %c144_156], %157 {strides = array<i32>} : memref<1x8x256xf32, #tpu.memory_space<vmem>>, vector<1x8x16xf32>,
    %158 = vector.extract_strided_slice %117 {offsets = [0, 180], sizes = [8, 16], strides = [1, 1]} : vector<8x288xf32> to vector<8x16xf32>
    %c0_157 = arith.constant 0 : index
    %c0_158 = arith.constant 0 : index
    %c160_159 = arith.constant 160 : index
    %159 = vector.load %arg6[%c0_157, %c0_158, %c160_159] : memref<1x8x256xf32, #tpu.memory_space<vmem>>, vector<1x8x16xf32>
    %160 = vector.shape_cast %159 : vector<1x8x16xf32> to vector<8x16xf32>
    %161 = vector.shape_cast %158 : vector<8x16xf32> to vector<1x8x16xf32>
    tpu.vector_store %arg6[%c0_157, %c0_158, %c160_159], %161 {strides = array<i32>} : memref<1x8x256xf32, #tpu.memory_space<vmem>>, vector<1x8x16xf32>,
    %162 = vector.extract_strided_slice %117 {offsets = [0, 198], sizes = [8, 16], strides = [1, 1]} : vector<8x288xf32> to vector<8x16xf32>
    %c0_160 = arith.constant 0 : index
    %c0_161 = arith.constant 0 : index
    %c176_162 = arith.constant 176 : index
    %163 = vector.load %arg6[%c0_160, %c0_161, %c176_162] : memref<1x8x256xf32, #tpu.memory_space<vmem>>, vector<1x8x16xf32>
    %164 = vector.shape_cast %163 : vector<1x8x16xf32> to vector<8x16xf32>
    %165 = vector.shape_cast %162 : vector<8x16xf32> to vector<1x8x16xf32>
    tpu.vector_store %arg6[%c0_160, %c0_161, %c176_162], %165 {strides = array<i32>} : memref<1x8x256xf32, #tpu.memory_space<vmem>>, vector<1x8x16xf32>,
    %166 = vector.extract_strided_slice %117 {offsets = [0, 216], sizes = [8, 16], strides = [1, 1]} : vector<8x288xf32> to vector<8x16xf32>
    %c0_163 = arith.constant 0 : index
    %c0_164 = arith.constant 0 : index
    %c192_165 = arith.constant 192 : index
    %167 = vector.load %arg6[%c0_163, %c0_164, %c192_165] : memref<1x8x256xf32, #tpu.memory_space<vmem>>, vector<1x8x16xf32>
    %168 = vector.shape_cast %167 : vector<1x8x16xf32> to vector<8x16xf32>
    %169 = vector.shape_cast %166 : vector<8x16xf32> to vector<1x8x16xf32>
    tpu.vector_store %arg6[%c0_163, %c0_164, %c192_165], %169 {strides = array<i32>} : memref<1x8x256xf32, #tpu.memory_space<vmem>>, vector<1x8x16xf32>,
    %170 = vector.extract_strided_slice %117 {offsets = [0, 234], sizes = [8, 16], strides = [1, 1]} : vector<8x288xf32> to vector<8x16xf32>
    %c0_166 = arith.constant 0 : index
    %c0_167 = arith.constant 0 : index
    %c208_168 = arith.constant 208 : index
    %171 = vector.load %arg6[%c0_166, %c0_167, %c208_168] : memref<1x8x256xf32, #tpu.memory_space<vmem>>, vector<1x8x16xf32>
    %172 = vector.shape_cast %171 : vector<1x8x16xf32> to vector<8x16xf32>
    %173 = vector.shape_cast %170 : vector<8x16xf32> to vector<1x8x16xf32>
    tpu.vector_store %arg6[%c0_166, %c0_167, %c208_168], %173 {strides = array<i32>} : memref<1x8x256xf32, #tpu.memory_space<vmem>>, vector<1x8x16xf32>,
    %174 = vector.extract_strided_slice %117 {offsets = [0, 252], sizes = [8, 16], strides = [1, 1]} : vector<8x288xf32> to vector<8x16xf32>
    %c0_169 = arith.constant 0 : index
    %c0_170 = arith.constant 0 : index
    %c224_171 = arith.constant 224 : index
    %175 = vector.load %arg6[%c0_169, %c0_170, %c224_171] : memref<1x8x256xf32, #tpu.memory_space<vmem>>, vector<1x8x16xf32>
    %176 = vector.shape_cast %175 : vector<1x8x16xf32> to vector<8x16xf32>
    %177 = vector.shape_cast %174 : vector<8x16xf32> to vector<1x8x16xf32>
    tpu.vector_store %arg6[%c0_169, %c0_170, %c224_171], %177 {strides = array<i32>} : memref<1x8x256xf32, #tpu.memory_space<vmem>>, vector<1x8x16xf32>,
    %178 = vector.extract_strided_slice %117 {offsets = [0, 270], sizes = [8, 16], strides = [1, 1]} : vector<8x288xf32> to vector<8x16xf32>
    %c0_172 = arith.constant 0 : index
    %c0_173 = arith.constant 0 : index
    %c240_174 = arith.constant 240 : index
    %179 = vector.load %arg6[%c0_172, %c0_173, %c240_174] : memref<1x8x256xf32, #tpu.memory_space<vmem>>, vector<1x8x16xf32>
    %180 = vector.shape_cast %179 : vector<1x8x16xf32> to vector<8x16xf32>
    %181 = vector.shape_cast %178 : vector<8x16xf32> to vector<1x8x16xf32>
    tpu.vector_store %arg6[%c0_172, %c0_173, %c240_174], %181 {strides = array<i32>} : memref<1x8x256xf32, #tpu.memory_space<vmem>>, vector<1x8x16xf32>,
    return
  }
  func.func @transform_0(%arg0: i32) -> (i32, i32, i32) {
    %c0_i32 = arith.constant 0 : i32
    %c0_i32_0 = arith.constant 0 : i32
    %c0_i32_1 = arith.constant 0 : i32
    return %arg0, %c0_i32, %c0_i32_0 : i32, i32, i32
  }
  func.func @transform_1(%arg0: i32) -> (i32, i32) {
    %c0_i32 = arith.constant 0 : i32
    %c0_i32_0 = arith.constant 0 : i32
    %c0_i32_1 = arith.constant 0 : i32
    return %c0_i32, %c0_i32_0 : i32, i32
  }
  func.func @transform_2(%arg0: i32) -> (i32, i32) {
    %c0_i32 = arith.constant 0 : i32
    %c0_i32_0 = arith.constant 0 : i32
    %c0_i32_1 = arith.constant 0 : i32
    return %c0_i32, %c0_i32_0 : i32, i32
  }
  func.func @transform_3(%arg0: i32) -> (i32, i32) {
    %c0_i32 = arith.constant 0 : i32
    %c0_i32_0 = arith.constant 0 : i32
    %c0_i32_1 = arith.constant 0 : i32
    return %c0_i32, %c0_i32_0 : i32, i32
  }
  func.func @transform_4(%arg0: i32) -> (i32, i32) {
    %c0_i32 = arith.constant 0 : i32
    %c0_i32_0 = arith.constant 0 : i32
    %c0_i32_1 = arith.constant 0 : i32
    return %c0_i32, %c0_i32_0 : i32, i32
  }
  func.func @transform_5(%arg0: i32) -> (i32, i32, i32) {
    %c0_i32 = arith.constant 0 : i32
    %c0_i32_0 = arith.constant 0 : i32
    %c0_i32_1 = arith.constant 0 : i32
    return %arg0, %c0_i32, %c0_i32_0 : i32, i32, i32
  }
}

</mosaic_0001>

<llo_original>
// kernel: conv_block_forward.1
$region0: #{conv_block_forward.1}
  #allocation0 [shape = 'u32[]', space=smem, size = 0x4, offset = 0x4, fixed_abs, tag = 'smem constant byte address 0x4 - core index']
  #allocation1 [shape = 'u32[144,128]{1,0:T(1,128)}', space=vmem, size = 0x12000, scoped, tag = 'internal scratch']
  #allocation2 [shape = 'f32[8,384]{1,0:T(8,128)}', space=vmem, size = 0x3000, scoped, tag = 'scratch operand']
  #allocation3 [shape = 'f32[8,384]{1,0:T(8,128)}', space=vmem, size = 0x3000, scoped, tag = 'scratch operand']
  %s0 = inlined_call_operand.vmem [shape: f32[2,4,256], index: 0, kind: input, shape index: {}]
  %s1 = inlined_call_operand.vmem [shape: f32[8,72], index: 1, kind: input, shape index: {}]
  %s2 = inlined_call_operand.vmem [shape: f32[8,1], index: 2, kind: input, shape index: {}]
  %s3 = inlined_call_operand.vmem [shape: f32[8,72], index: 3, kind: input, shape index: {}]
  %s4 = inlined_call_operand.vmem [shape: f32[8,1], index: 4, kind: input, shape index: {}]
  %s5 = inlined_call_operand.vmem [shape: f32[2,8,256], index: 5, kind: output, shape index: {}]
  %s6 = sld [smem:[#allocation0]]
  $region53: #{conv_block_forward.1} parent=0
    _
  %s8 = ssub.s32 1, %s6
  %s9 = scalar_select 0, %s8, %s6
  loop: start=0, step=1, limit=4
  $region2: #{conv_block_forward.1} parent=0 // loop_pre_header
    _
  $region3: #{conv_block_forward.1} parent=0 // loop_header
    %s11 = sphi 0, %s15
    %p12 = scmp.ge.s32.totalorder %s11, 4
    %s21 = sphi 0, %s23
    %s24 = sphi 0, %s21
    %s25 = sphi 0, %s24
    %s41 = sphi 0, %s25
    %s45 = sphi 0, %s45
    %s47 = sphi 0, %s45
    %s48 = sphi 0, %s47
    %s62 = sphi 0, %s48
    %s66 = sphi 0, %s66
    %s68 = sphi 0, %s66
    %s69 = sphi 0, %s68
    %s83 = sphi 0, %s69
    %s87 = sphi 0, %s87
    %s89 = sphi 0, %s87
    %s90 = sphi 0, %s89
    %s104 = sphi 0, %s90
    %s108 = sphi 0, %s108
    %s110 = sphi 0, %s108
    %s111 = sphi 0, %s110
    %s125 = sphi 0, %s111
    %s131 = sphi 0, %s133
    %s134 = sphi 0, %s131
    %s135 = sphi 0, %s134
    %s151 = sphi 0, %s135
  $region4: #{conv_block_forward.1} parent=0 // loop_header_branch
    %14 = sbr.rel (%p12) target = $region8
  $region5: #{conv_block_forward.1} parent=0 // loop_body
    %s16 = ssub.s32 %s11, 1
    %s17 = ssub.s32 %s11, 2
    %s18 = sadd.s32 %s11, 1
    %s19 = ssub.s32 %s11, %s18
    %p20 = scmp.eq.s32.totalorder %s19, 0
    %s22 = sadd.s32 %s21, 1
    %s23 = scalar_select %p20, %s21, %s22
    %p26 = pneg %p20
    %p27 = scmp.eq.s32.totalorder %s11, 1
    %p28 = por %p26, %p27
    %p29 = scmp.ne.s32.totalorder %s21, %s24
    %p30 = scmp.eq.s32.totalorder %s11, 0
    %p31 = por %p29, %p30
    %p32 = scmp.ne.s32.totalorder %s21, %s24
    %p33 = scmp.eq.s32.totalorder %s16, 1
    %p34 = por %p32, %p33
    %p35 = scmp.ne.s32.totalorder %s24, %s25
    %p36 = scmp.eq.s32.totalorder %s16, 0
    %p37 = por %p35, %p36
    %p38 = scmp.ne.s32.totalorder %s24, %s25
    %p39 = scmp.eq.s32.totalorder %s17, 1
    %p40 = por %p38, %p39
    %p42 = scmp.ne.s32.totalorder %s25, %s41
    %p43 = scmp.eq.s32.totalorder %s17, 0
    %p44 = por %p42, %p43
    %s46 = sadd.s32 %s45, 1
    %p49 = scmp.eq.s32.totalorder %s11, 1
    %p50 = scmp.ne.s32.totalorder %s45, %s47
    %p51 = scmp.eq.s32.totalorder %s11, 0
    %p52 = por %p50, %p51
    %p53 = scmp.ne.s32.totalorder %s45, %s47
    %p54 = scmp.eq.s32.totalorder %s16, 1
    %p55 = por %p53, %p54
    %p56 = scmp.ne.s32.totalorder %s47, %s48
    %p57 = scmp.eq.s32.totalorder %s16, 0
    %p58 = por %p56, %p57
    %p59 = scmp.ne.s32.totalorder %s47, %s48
    %p60 = scmp.eq.s32.totalorder %s17, 1
    %p61 = por %p59, %p60
    %p63 = scmp.ne.s32.totalorder %s48, %s62
    %p64 = scmp.eq.s32.totalorder %s17, 0
    %p65 = por %p63, %p64
    %s67 = sadd.s32 %s66, 1
    %p70 = scmp.eq.s32.totalorder %s11, 1
    %p71 = scmp.ne.s32.totalorder %s66, %s68
    %p72 = scmp.eq.s32.totalorder %s11, 0
    %p73 = por %p71, %p72
    %p74 = scmp.ne.s32.totalorder %s66, %s68
    %p75 = scmp.eq.s32.totalorder %s16, 1
    %p76 = por %p74, %p75
    %p77 = scmp.ne.s32.totalorder %s68, %s69
    %p78 = scmp.eq.s32.totalorder %s16, 0
    %p79 = por %p77, %p78
    %p80 = scmp.ne.s32.totalorder %s68, %s69
    %p81 = scmp.eq.s32.totalorder %s17, 1
    %p82 = por %p80, %p81
    %p84 = scmp.ne.s32.totalorder %s69, %s83
    %p85 = scmp.eq.s32.totalorder %s17, 0
    %p86 = por %p84, %p85
    %s88 = sadd.s32 %s87, 1
    %p91 = scmp.eq.s32.totalorder %s11, 1
    %p92 = scmp.ne.s32.totalorder %s87, %s89
    %p93 = scmp.eq.s32.totalorder %s11, 0
    %p94 = por %p92, %p93
    %p95 = scmp.ne.s32.totalorder %s87, %s89
    %p96 = scmp.eq.s32.totalorder %s16, 1
    %p97 = por %p95, %p96
    %p98 = scmp.ne.s32.totalorder %s89, %s90
    %p99 = scmp.eq.s32.totalorder %s16, 0
    %p100 = por %p98, %p99
    %p101 = scmp.ne.s32.totalorder %s89, %s90
    %p102 = scmp.eq.s32.totalorder %s17, 1
    %p103 = por %p101, %p102
    %p105 = scmp.ne.s32.totalorder %s90, %s104
    %p106 = scmp.eq.s32.totalorder %s17, 0
    %p107 = por %p105, %p106
    %s109 = sadd.s32 %s108, 1
    %p112 = scmp.eq.s32.totalorder %s11, 1
    %p113 = scmp.ne.s32.totalorder %s108, %s110
    %p114 = scmp.eq.s32.totalorder %s11, 0
    %p115 = por %p113, %p114
    %p116 = scmp.ne.s32.totalorder %s108, %s110
    %p117 = scmp.eq.s32.totalorder %s16, 1
    %p118 = por %p116, %p117
    %p119 = scmp.ne.s32.totalorder %s110, %s111
    %p120 = scmp.eq.s32.totalorder %s16, 0
    %p121 = por %p119, %p120
    %p122 = scmp.ne.s32.totalorder %s110, %s111
    %p123 = scmp.eq.s32.totalorder %s17, 1
    %p124 = por %p122, %p123
    %p126 = scmp.ne.s32.totalorder %s111, %s125
    %p127 = scmp.eq.s32.totalorder %s17, 0
    %p128 = por %p126, %p127
    %s129 = ssub.s32 %s11, %s18
    %p130 = scmp.eq.s32.totalorder %s129, 0
    %s132 = sadd.s32 %s131, 1
    %s133 = scalar_select %p130, %s131, %s132
    %p136 = pneg %p130
    %p137 = scmp.eq.s32.totalorder %s11, 1
    %p138 = por %p136, %p137
    %p139 = scmp.ne.s32.totalorder %s131, %s134
    %p140 = scmp.eq.s32.totalorder %s11, 0
    %p141 = por %p139, %p140
    %p142 = scmp.ne.s32.totalorder %s131, %s134
    %p143 = scmp.eq.s32.totalorder %s16, 1
    %p144 = por %p142, %p143
    %p145 = scmp.ne.s32.totalorder %s134, %s135
    %p146 = scmp.eq.s32.totalorder %s16, 0
    %p147 = por %p145, %p146
    %p148 = scmp.ne.s32.totalorder %s134, %s135
    %p149 = scmp.eq.s32.totalorder %s17, 1
    %p150 = por %p148, %p149
    %p152 = scmp.ne.s32.totalorder %s135, %s151
    %p153 = scmp.eq.s32.totalorder %s17, 0
    %p154 = por %p152, %p153
    %p155 = scmp.le.s32.totalorder 1, %s11
    %p156 = scmp.lt.s32.totalorder %s11, 3
    %p157 = pnand %p155, %p156
    %p158 = pneg %p157
    // Predicated region
    $region9: #{conv_block_forward.1} parent=5 // pred_check
      _
    $region10: #{conv_block_forward.1} parent=5 // pred_check_branch
      %160 = sbr.rel (%p157) target = $region12
    $region11: #{conv_block_forward.1} parent=5 // pred_region
      %s161 = ssub.s32 %s11, 1
      // Predicated region
      $region13: #{conv_block_forward.1} parent=11 // pred_check
        %p162 = pneg %p58
      $region14: #{conv_block_forward.1} parent=11 // pred_check_branch
        %164 = sbr.rel (%p162) target = $region16
      $region15: #{conv_block_forward.1} parent=11 // pred_region
        _
      $region16: #{conv_block_forward.1} parent=11 // pred_fallthru
        _
      // Predicated region
      $region17: #{conv_block_forward.1} parent=11 // pred_check
        %p165 = pneg %p79
      $region18: #{conv_block_forward.1} parent=11 // pred_check_branch
        %167 = sbr.rel (%p165) target = $region20
      $region19: #{conv_block_forward.1} parent=11 // pred_region
        _
      $region20: #{conv_block_forward.1} parent=11 // pred_fallthru
        _
      // Predicated region
      $region21: #{conv_block_forward.1} parent=11 // pred_check
        %p168 = pneg %p100
      $region22: #{conv_block_forward.1} parent=11 // pred_check_branch
        %170 = sbr.rel (%p168) target = $region24
      $region23: #{conv_block_forward.1} parent=11 // pred_region
        _
      $region24: #{conv_block_forward.1} parent=11 // pred_fallthru
        _
      // Predicated region
      $region25: #{conv_block_forward.1} parent=11 // pred_check
        %p171 = pneg %p121
      $region26: #{conv_block_forward.1} parent=11 // pred_check_branch
        %173 = sbr.rel (%p171) target = $region28
      $region27: #{conv_block_forward.1} parent=11 // pred_region
        _
      $region28: #{conv_block_forward.1} parent=11 // pred_fallthru
        _
    $region12: #{conv_block_forward.1} parent=5 // pred_fallthru
      _
    %p174 = scmp.lt.s32.totalorder %s11, 2
    // Predicated region
    $region29: #{conv_block_forward.1} parent=5 // pred_check
      %p175 = pneg %p174
    $region30: #{conv_block_forward.1} parent=5 // pred_check_branch
      %177 = sbr.rel (%p175) target = $region32
    $region31: #{conv_block_forward.1} parent=5 // pred_region
      // Predicated region
      $region33: #{conv_block_forward.1} parent=31 // pred_check
        %p178 = pneg %p31
      $region34: #{conv_block_forward.1} parent=31 // pred_check_branch
        %180 = sbr.rel (%p178) target = $region36
      $region35: #{conv_block_forward.1} parent=31 // pred_region
        %p181 = scmp.lt.s32.totalorder %s11, 1
        %s182 = scalar_select %p181, %s11, 1
        %s183 = smul.addr %s182, 2
        %s184 = smul.addr %s183, 4
        %s185 = scalar_lea.vmem %s0, %s184
      $region36: #{conv_block_forward.1} parent=31 // pred_fallthru
        _
    $region32: #{conv_block_forward.1} parent=5 // pred_fallthru
      _
    %p186 = scmp.le.s32.totalorder 1, %s11
    %p187 = scmp.lt.s32.totalorder %s11, 3
    %p188 = pnand %p186, %p187
    %p189 = pneg %p188
    // Predicated region
    $region37: #{conv_block_forward.1} parent=5 // pred_check
      _
    $region38: #{conv_block_forward.1} parent=5 // pred_check_branch
      %191 = sbr.rel (%p188) target = $region40
    $region39: #{conv_block_forward.1} parent=5 // pred_region
      %s192 = ssub.s32 %s11, 1
      %p193 = scmp.lt.s32.totalorder %s16, 1
      %s194 = scalar_select %p193, %s16, 1
      %s195 = smul.addr %s194, 2
      %s196 = smul.addr %s195, 4
      %s197 = scalar_lea.vmem %s0, %s196
      %p198 = pneg %p37
      %p199 = pneg %p34
      %p200 = pneg %p58
      %p201 = pneg %p55
      %p202 = pneg %p79
      %p203 = pneg %p76
      %p204 = pneg %p100
      %p205 = pneg %p97
      %p206 = pneg %p121
      %p207 = pneg %p118
      %p208 = pneg %p147
      %p209 = pneg %p144
      %p210 = scmp.lt.s32.totalorder %s16, 1
      %s211 = scalar_select %p210, %s16, 1
      %s212 = smul.addr %s211, 2
      %s213 = smul.addr %s212, 8
      %s214 = scalar_lea.vmem %s5, %s213
      %p215 = scmp.lt.s32.totalorder %s16, 1
      %s216 = scalar_select %p215, %s16, 1
      %s217 = smul.addr %s216, 2
      %s218 = smul.addr %s217, 4
      %s219 = scalar_lea.vmem %s0, %s218
      %p220 = scmp.lt.s32.totalorder %s16, 1
      %s221 = scalar_select %p220, %s16, 1
      %s222 = smul.addr %s221, 2
      %s223 = smul.addr %s222, 8
      %s224 = scalar_lea.vmem %s5, %s223
      %225 = vst [vmem:[#allocation2] sm:$0xff] 0.0
      %226 = vst [vmem:[#allocation2 + $0x8] sm:$0xff] 0.0
      %227 = vst [vmem:[#allocation2 + $0x10] sm:$0xff] 0.0
      %228 = vst [vmem:[#allocation3] sm:$0xff] 0.0
      %229 = vst [vmem:[#allocation3 + $0x8] sm:$0xff] 0.0
      %230 = vst [vmem:[#allocation3 + $0x10] sm:$0xff] 0.0
      %v231 = vld [vmem:[%s219] sm:$0xf]
      %233 = vrot.lane.b32.xlu0 %v231, 19
      %v234 = vpop.permute.xlu0 %233
      %vm236 = vcmask 281752
      %237 = vst.msk [vmem:[#allocation2] sm:$0xf] %vm236, %v234
      %v238 = vld [vmem:[%s219] sm:$0xf]
      %240 = vrot.lane.b32.xlu0 %v238, 21
      %v241 = vpop.permute.xlu0 %240
      %vm243 = vcmask 429352
      %244 = vst.msk [vmem:[#allocation2] sm:$0xf] %vm243, %v241
      %v245 = vld [vmem:[%s219] sm:$0xf]
      %247 = vrot.lane.b32.xlu0 %v245, 23
      %v248 = vpop.permute.xlu0 %247
      %vm250 = vcmask 576952
      %251 = vst.msk [vmem:[#allocation2] sm:$0xf] %vm250, %v248
      %v252 = vld [vmem:[%s219] sm:$0xf]
      %254 = vrot.lane.b32.xlu0 %v252, 25
      %v255 = vpop.permute.xlu0 %254
      %vm257 = vcmask 724552
      %258 = vst.msk [vmem:[#allocation2] sm:$0xf] %vm257, %v255
      %v259 = vld [vmem:[%s219] sm:$0xf]
      %261 = vrot.lane.b32.xlu0 %v259, 27
      %v262 = vpop.permute.xlu0 %261
      %vm264 = vcmask 872152
      %265 = vst.msk [vmem:[#allocation2] sm:$0xf] %vm264, %v262
      %v266 = vld [vmem:[%s219] sm:$0xf]
      %268 = vrot.lane.b32.xlu0 %v266, 29
      %v269 = vpop.permute.xlu0 %268
      %vm271 = vcmask 1019752
      %272 = vst.msk [vmem:[#allocation2] sm:$0xf] %vm271, %v269
      %v273 = vld [vmem:[%s219] sm:$0xf]
      %275 = vrot.lane.b32.xlu0 %v273, 31
      %v276 = vpop.permute.xlu0 %275
      %vm278 = vcmask 1044472
      %279 = vst.msk [vmem:[#allocation2] sm:$0xf] %vm278, %v276
      %vm280 = vcmask 117760
      %281 = vst.msk [vmem:[#allocation2 + $0x8] sm:$0xf] %vm280, %v276
      %v282 = vld [vmem:[%s219] sm:$0xf]
      %284 = vrot.lane.b32.xlu0 %v282, 33
      %v285 = vpop.permute.xlu0 %284
      %vm287 = vcmask 265352
      %288 = vst.msk [vmem:[#allocation2 + $0x8] sm:$0xf] %vm287, %v285
      %v289 = vld [vmem:[%s219 + $0x4] sm:$0xf]
      %291 = vrot.lane.b32.xlu0 %v289, 35
      %v292 = vpop.permute.xlu0 %291
      %vm294 = vcmask 412952
      %295 = vst.msk [vmem:[#allocation2 + $0x8] sm:$0xf] %vm294, %v292
      %v296 = vld [vmem:[%s219 + $0x4] sm:$0xf]
      %298 = vrot.lane.b32.xlu0 %v296, 37
      %v299 = vpop.permute.xlu0 %298
      %vm301 = vcmask 560552
      %302 = vst.msk [vmem:[#allocation2 + $0x8] sm:$0xf] %vm301, %v299
      %v303 = vld [vmem:[%s219 + $0x4] sm:$0xf]
      %305 = vrot.lane.b32.xlu0 %v303, 39
      %v306 = vpop.permute.xlu0 %305
      %vm308 = vcmask 708152
      %309 = vst.msk [vmem:[#allocation2 + $0x8] sm:$0xf] %vm308, %v306
      %v310 = vld [vmem:[%s219 + $0x4] sm:$0xf]
      %312 = vrot.lane.b32.xlu0 %v310, 41
      %v313 = vpop.permute.xlu0 %312
      %vm315 = vcmask 855752
      %316 = vst.msk [vmem:[#allocation2 + $0x8] sm:$0xf] %vm315, %v313
      %v317 = vld [vmem:[%s219 + $0x4] sm:$0xf]
      %319 = vrot.lane.b32.xlu0 %v317, 43
      %v320 = vpop.permute.xlu0 %319
      %vm322 = vcmask 1003352
      %323 = vst.msk [vmem:[#allocation2 + $0x8] sm:$0xf] %vm322, %v320
      %v324 = vld [vmem:[%s219 + $0x4] sm:$0xf]
      %326 = vrot.lane.b32.xlu0 %v324, 45
      %v327 = vpop.permute.xlu0 %326
      %vm329 = vcmask 1044456
      %330 = vst.msk [vmem:[#allocation2 + $0x8] sm:$0xf] %vm329, %v327
      %vm331 = vcmask 101376
      %332 = vst.msk [vmem:[#allocation2 + $0x10] sm:$0xf] %vm331, %v327
      %v333 = vld [vmem:[%s219 + $0x4] sm:$0xf]
      %335 = vrot.lane.b32.xlu0 %v333, 47
      %v336 = vpop.permute.xlu0 %335
      %vm338 = vcmask 248952
      %339 = vst.msk [vmem:[#allocation2 + $0x10] sm:$0xf] %vm338, %v336
      %v340 = vld [vmem:[%s219 + $0x4] sm:$0xf]
      %342 = vrot.lane.b32.xlu0 %v340, 49
      %v343 = vpop.permute.xlu0 %342
      %vm345 = vcmask 396552
      %346 = vst.msk [vmem:[#allocation2 + $0x10] sm:$0xf] %vm345, %v343
      %v347 = vld [vmem:[#allocation2] sm:$0xff]
      %v348 = vld [vmem:[#allocation2 + $0x8] sm:$0xff]
      %v349 = vld [vmem:[#allocation2 + $0x10] sm:$0xff]
      %353 = vrot.lane.b32.xlu0 %v347, 127
      %v354 = vpop.permute.xlu0 %353
      %355 = vrot.lane.b32.xlu0 %v348, 127
      %v356 = vpop.permute.xlu0 %355
      %357 = vrot.lane.b32.xlu0 %v349, 127
      %v358 = vpop.permute.xlu0 %357
      %vm359 = vcmask 1039360
      %v360 = vsel %vm359, %v354, %v356
      %v361 = vsel %vm359, %v356, %v358
      %365 = vrot.lane.b32.xlu0 %v347, 126
      %v366 = vpop.permute.xlu0 %365
      %367 = vrot.lane.b32.xlu0 %v348, 126
      %v368 = vpop.permute.xlu0 %367
      %369 = vrot.lane.b32.xlu0 %v349, 126
      %v370 = vpop.permute.xlu0 %369
      %vm371 = vcmask 1031168
      %v372 = vsel %vm371, %v366, %v368
      %v373 = vsel %vm371, %v368, %v370
      %377 = vrot.lane.b32.xlu0 %v347, 110
      %v378 = vpop.permute.xlu0 %377
      %379 = vrot.lane.b32.xlu0 %v348, 110
      %v380 = vpop.permute.xlu0 %379
      %381 = vrot.lane.b32.xlu0 %v349, 110
      %v382 = vpop.permute.xlu0 %381
      %vm383 = vcmask 900096
      %v384 = vsel %vm383, %v378, %v380
      %v385 = vsel %vm383, %v380, %v382
      %389 = vrot.lane.b32.xlu0 %v347, 109
      %v390 = vpop.permute.xlu0 %389
      %391 = vrot.lane.b32.xlu0 %v348, 109
      %v392 = vpop.permute.xlu0 %391
      %393 = vrot.lane.b32.xlu0 %v349, 109
      %v394 = vpop.permute.xlu0 %393
      %vm395 = vcmask 891904
      %v396 = vsel %vm395, %v390, %v392
      %v397 = vsel %vm395, %v392, %v394
      %401 = vrot.lane.b32.xlu0 %v347, 108
      %v402 = vpop.permute.xlu0 %401
      %403 = vrot.lane.b32.xlu0 %v348, 108
      %v404 = vpop.permute.xlu0 %403
      %405 = vrot.lane.b32.xlu0 %v349, 108
      %v406 = vpop.permute.xlu0 %405
      %vm407 = vcmask 883712
      %v408 = vsel %vm407, %v402, %v404
      %v409 = vsel %vm407, %v404, %v406
      %413 = vrot.lane.b32.xlu0 %v347, 92
      %v414 = vpop.permute.xlu0 %413
      %415 = vrot.lane.b32.xlu0 %v348, 92
      %v416 = vpop.permute.xlu0 %415
      %417 = vrot.lane.b32.xlu0 %v349, 92
      %v418 = vpop.permute.xlu0 %417
      %vm419 = vcmask 752640
      %v420 = vsel %vm419, %v414, %v416
      %v421 = vsel %vm419, %v416, %v418
      %425 = vrot.lane.b32.xlu0 %v347, 91
      %v426 = vpop.permute.xlu0 %425
      %427 = vrot.lane.b32.xlu0 %v348, 91
      %v428 = vpop.permute.xlu0 %427
      %429 = vrot.lane.b32.xlu0 %v349, 91
      %v430 = vpop.permute.xlu0 %429
      %vm431 = vcmask 744448
      %v432 = vsel %vm431, %v426, %v428
      %v433 = vsel %vm431, %v428, %v430
      %437 = vrot.lane.b32.xlu0 %v347, 90
      %v438 = vpop.permute.xlu0 %437
      %439 = vrot.lane.b32.xlu0 %v348, 90
      %v440 = vpop.permute.xlu0 %439
      %441 = vrot.lane.b32.xlu0 %v349, 90
      %v442 = vpop.permute.xlu0 %441
      %vm443 = vcmask 736256
      %v444 = vsel %vm443, %v438, %v440
      %v445 = vsel %vm443, %v440, %v442
      %v449 = vld [vmem:[%s1] sm:$0xff]
      %v450 = vld [vmem:[%s2] sm:$0xff]
      %452 = vset.pattern.permute.xlu0 0
      %453 = vperm.xlu0 %452, %v450
      %v454 = vpop.permute.xlu0 %453
      %vm456 = vcmask 588800
      %v458 = vsel %vm456, %v449, 0
      %460 = vmatprep.subr.mxu0 0.0
      %461 = vmatpush1.msra.mxu0 0.0
      %462 = vmatprep.subr.mxu0 0.0
      %463 = vmatpush1.msra.mxu0 0.0
      %464 = vmatprep.subr.mxu0 0.0
      %465 = vmatpush1.msra.mxu0 0.0
      %466 = vmatprep.subr.mxu0 0.0
      %467 = vmatpush1.msra.mxu0 0.0
      %468 = vmatprep.subr.mxu0 0.0
      %469 = vmatpush1.msra.mxu0 0.0
      %470 = vmatprep.subr.mxu0 0.0
      %471 = vmatpush1.msra.mxu0 0.0
      %472 = vmatprep.subr.mxu0 0.0
      %473 = vmatpush1.msra.mxu0 0.0
      %474 = vmatprep.subr.mxu0 %v445
      %475 = vmatpush1.msra.mxu0 %v444
      %476 = vmatprep.subr.mxu0 %v433
      %477 = vmatpush1.msra.mxu0 %v432
      %478 = vmatprep.subr.mxu0 %v421
      %479 = vmatpush1.msra.mxu0 %v420
      %480 = vmatprep.subr.mxu0 %v409
      %481 = vmatpush1.msra.mxu0 %v408
      %482 = vmatprep.subr.mxu0 %v397
      %483 = vmatpush1.msra.mxu0 %v396
      %484 = vmatprep.subr.mxu0 %v385
      %485 = vmatpush1.msra.mxu0 %v384
      %486 = vmatprep.subr.mxu0 %v373
      %487 = vmatpush1.msra.mxu0 %v372
      %488 = vmatprep.subr.mxu0 %v361
      %489 = vmatpush1.msra.mxu0 %v360
      %490 = vmatprep.subr.mxu0 %v348
      %491 = vmatpush1.msra.mxu0 %v347
      %492 = vmatprep.subr.mxu0 0.0
      %493 = vmatpush2.msra.mxu0 0.0
      %494 = vmatprep.subr.mxu0 0.0
      %495 = vmatpush2.msra.mxu0 0.0
      %496 = vmatprep.subr.mxu0 0.0
      %497 = vmatpush2.msra.mxu0 0.0
      %498 = vmatprep.subr.mxu0 0.0
      %499 = vmatpush2.msra.mxu0 0.0
      %500 = vmatprep.subr.mxu0 0.0
      %501 = vmatpush2.msra.mxu0 0.0
      %502 = vmatprep.subr.mxu0 0.0
      %503 = vmatpush2.msra.mxu0 0.0
      %504 = vmatprep.subr.mxu0 0.0
      %505 = vmatpush2.msra.mxu0 0.0
      %506 = vmatprep.subr.mxu0 0.0
      %507 = vmatpush2.msra.mxu0 0.0
      %508 = vmatprep.subr.mxu0 0.0
      %509 = vmatpush2.msra.mxu0 0.0
      %510 = vmatprep.subr.mxu0 0.0
      %511 = vmatpush2.msra.mxu0 0.0
      %512 = vmatprep.subr.mxu0 0.0
      %513 = vmatpush2.msra.mxu0 0.0
      %514 = vmatprep.subr.mxu0 0.0
      %515 = vmatpush2.msra.mxu0 0.0
      %516 = vmatprep.subr.mxu0 0.0
      %517 = vmatpush2.msra.mxu0 0.0
      %518 = vmatprep.subr.mxu0 0.0
      %519 = vmatpush2.msra.mxu0 0.0
      %520 = vmatprep.subr.mxu0 0.0
      %521 = vmatpush2.msra.mxu0 0.0
      %522 = vmatprep.subr.mxu0 0.0
      %523 = vmatpush2.msra.mxu0 0.0
      %524 = vmatprep.mubr.f32.mxu0 0.0
      %525 = vmatmul.mubr.f32.gmra.mxu0 %v458
      %v526 = vpop.f32.mrf.mxu0
      %v527 = vadd.f32 %v454, %v526
      %v528 = vpop.f32.mrf.mxu0
      %v529 = vadd.f32 %v454, %v528
      %530 = vdwg.mxu0
      %531 = vmatprep.subr.mxu0 0.0
      %532 = vmatpush1.msra.mxu0 0.0
      %533 = vmatprep.subr.mxu0 0.0
      %534 = vmatpush1.msra.mxu0 0.0
      %535 = vmatprep.subr.mxu0 0.0
      %536 = vmatpush1.msra.mxu0 0.0
      %537 = vmatprep.subr.mxu0 0.0
      %538 = vmatpush1.msra.mxu0 0.0
      %539 = vmatprep.subr.mxu0 0.0
      %540 = vmatpush1.msra.mxu0 0.0
      %541 = vmatprep.subr.mxu0 0.0
      %542 = vmatpush1.msra.mxu0 0.0
      %543 = vmatprep.subr.mxu0 0.0
      %544 = vmatpush1.msra.mxu0 0.0
      %545 = vmatprep.subr.mxu0 0.0
      %546 = vmatpush1.msra.mxu0 %v442
      %547 = vmatprep.subr.mxu0 0.0
      %548 = vmatpush1.msra.mxu0 %v430
      %549 = vmatprep.subr.mxu0 0.0
      %550 = vmatpush1.msra.mxu0 %v418
      %551 = vmatprep.subr.mxu0 0.0
      %552 = vmatpush1.msra.mxu0 %v406
      %553 = vmatprep.subr.mxu0 0.0
      %554 = vmatpush1.msra.mxu0 %v394
      %555 = vmatprep.subr.mxu0 0.0
      %556 = vmatpush1.msra.mxu0 %v382
      %557 = vmatprep.subr.mxu0 0.0
      %558 = vmatpush1.msra.mxu0 %v370
      %559 = vmatprep.subr.mxu0 0.0
      %560 = vmatpush1.msra.mxu0 %v358
      %561 = vmatprep.subr.mxu0 0.0
      %562 = vmatpush1.msra.mxu0 %v349
      %563 = vmatprep.subr.mxu0 0.0
      %564 = vmatpush2.msra.mxu0 0.0
      %565 = vmatprep.subr.mxu0 0.0
      %566 = vmatpush2.msra.mxu0 0.0
      %567 = vmatprep.subr.mxu0 0.0
      %568 = vmatpush2.msra.mxu0 0.0
      %569 = vmatprep.subr.mxu0 0.0
      %570 = vmatpush2.msra.mxu0 0.0
      %571 = vmatprep.subr.mxu0 0.0
      %572 = vmatpush2.msra.mxu0 0.0
      %573 = vmatprep.subr.mxu0 0.0
      %574 = vmatpush2.msra.mxu0 0.0
      %575 = vmatprep.subr.mxu0 0.0
      %576 = vmatpush2.msra.mxu0 0.0
      %577 = vmatprep.subr.mxu0 0.0
      %578 = vmatpush2.msra.mxu0 0.0
      %579 = vmatprep.subr.mxu0 0.0
      %580 = vmatpush2.msra.mxu0 0.0
      %581 = vmatprep.subr.mxu0 0.0
      %582 = vmatpush2.msra.mxu0 0.0
      %583 = vmatprep.subr.mxu0 0.0
      %584 = vmatpush2.msra.mxu0 0.0
      %585 = vmatprep.subr.mxu0 0.0
      %586 = vmatpush2.msra.mxu0 0.0
      %587 = vmatprep.subr.mxu0 0.0
      %588 = vmatpush2.msra.mxu0 0.0
      %589 = vmatprep.subr.mxu0 0.0
      %590 = vmatpush2.msra.mxu0 0.0
      %591 = vmatprep.subr.mxu0 0.0
      %592 = vmatpush2.msra.mxu0 0.0
      %593 = vmatprep.subr.mxu0 0.0
      %594 = vmatpush2.msra.mxu0 0.0
      %595 = vmatprep.mubr.f32.mxu0 0.0
      %596 = vmatmul.mubr.f32.gmra.mxu0 %v458
      %v597 = vpop.f32.mrf.mxu0
      %v598 = vadd.f32 %v454, %v597
      %v599 = vpop.f32.mrf.mxu0
      %600 = vdwg.mxu0
      %v601 = vmax.f32 %v527, 0.0
      %v602 = vmax.f32 %v529, 0.0
      %v603 = vmax.f32 %v598, 0.0
      %605 = vrot.lane.b32.xlu0 %v601, 19
      %v606 = vpop.permute.xlu0 %605
      %vm608 = vcmask 285848
      %609 = vst.msk [vmem:[#allocation3] sm:$0xff] %vm608, %v606
      %vm610 = vcmask 433448
      %611 = vst.msk [vmem:[#allocation3] sm:$0xff] %vm610, %v606
      %vm612 = vcmask 581048
      %613 = vst.msk [vmem:[#allocation3] sm:$0xff] %vm612, %v606
      %vm614 = vcmask 728648
      %615 = vst.msk [vmem:[#allocation3] sm:$0xff] %vm614, %v606
      %vm616 = vcmask 876248
      %617 = vst.msk [vmem:[#allocation3] sm:$0xff] %vm616, %v606
      %vm618 = vcmask 1023848
      %619 = vst.msk [vmem:[#allocation3] sm:$0xff] %vm618, %v606
      %vm620 = vcmask 1048568
      %621 = vst.msk [vmem:[#allocation3] sm:$0xff] %vm620, %v606
      %vm622 = vcmask 121856
      %623 = vst.msk [vmem:[#allocation3 + $0x8] sm:$0xff] %vm622, %v606
      %625 = vrot.lane.b32.xlu0 %v602, 19
      %v626 = vpop.permute.xlu0 %625
      %vm627 = vcmask 154624
      %v628 = vsel %vm627, %v606, %v626
      %vm630 = vcmask 269448
      %631 = vst.msk [vmem:[#allocation3 + $0x8] sm:$0xff] %vm630, %v628
      %vm633 = vcmask 417048
      %634 = vst.msk [vmem:[#allocation3 + $0x8] sm:$0xff] %vm633, %v626
      %vm635 = vcmask 564648
      %636 = vst.msk [vmem:[#allocation3 + $0x8] sm:$0xff] %vm635, %v626
      %vm637 = vcmask 712248
      %638 = vst.msk [vmem:[#allocation3 + $0x8] sm:$0xff] %vm637, %v626
      %vm639 = vcmask 859848
      %640 = vst.msk [vmem:[#allocation3 + $0x8] sm:$0xff] %vm639, %v626
      %vm641 = vcmask 1007448
      %642 = vst.msk [vmem:[#allocation3 + $0x8] sm:$0xff] %vm641, %v626
      %vm643 = vcmask 1048552
      %644 = vst.msk [vmem:[#allocation3 + $0x8] sm:$0xff] %vm643, %v626
      %vm645 = vcmask 105472
      %646 = vst.msk [vmem:[#allocation3 + $0x10] sm:$0xff] %vm645, %v626
      %648 = vrot.lane.b32.xlu0 %v603, 19
      %v649 = vpop.permute.xlu0 %648
      %v650 = vsel %vm627, %v626, %v649
      %vm652 = vcmask 253048
      %653 = vst.msk [vmem:[#allocation3 + $0x10] sm:$0xff] %vm652, %v650
      %vm655 = vcmask 400648
      %656 = vst.msk [vmem:[#allocation3 + $0x10] sm:$0xff] %vm655, %v649
      %v657 = vld [vmem:[#allocation3] sm:$0xff]
      %v658 = vld [vmem:[#allocation3 + $0x8] sm:$0xff]
      %v659 = vld [vmem:[#allocation3 + $0x10] sm:$0xff]
      %663 = vrot.lane.b32.xlu0 %v657, 127
      %v664 = vpop.permute.xlu0 %663
      %665 = vrot.lane.b32.xlu0 %v658, 127
      %v666 = vpop.permute.xlu0 %665
      %667 = vrot.lane.b32.xlu0 %v659, 127
      %v668 = vpop.permute.xlu0 %667
      %v669 = vsel %vm359, %v664, %v666
      %v670 = vsel %vm359, %v666, %v668
      %674 = vrot.lane.b32.xlu0 %v657, 126
      %v675 = vpop.permute.xlu0 %674
      %676 = vrot.lane.b32.xlu0 %v658, 126
      %v677 = vpop.permute.xlu0 %676
      %678 = vrot.lane.b32.xlu0 %v659, 126
      %v679 = vpop.permute.xlu0 %678
      %v680 = vsel %vm371, %v675, %v677
      %v681 = vsel %vm371, %v677, %v679
      %685 = vrot.lane.b32.xlu0 %v657, 110
      %v686 = vpop.permute.xlu0 %685
      %687 = vrot.lane.b32.xlu0 %v658, 110
      %v688 = vpop.permute.xlu0 %687
      %689 = vrot.lane.b32.xlu0 %v659, 110
      %v690 = vpop.permute.xlu0 %689
      %v691 = vsel %vm383, %v686, %v688
      %v692 = vsel %vm383, %v688, %v690
      %696 = vrot.lane.b32.xlu0 %v657, 109
      %v697 = vpop.permute.xlu0 %696
      %698 = vrot.lane.b32.xlu0 %v658, 109
      %v699 = vpop.permute.xlu0 %698
      %700 = vrot.lane.b32.xlu0 %v659, 109
      %v701 = vpop.permute.xlu0 %700
      %v702 = vsel %vm395, %v697, %v699
      %v703 = vsel %vm395, %v699, %v701
      %707 = vrot.lane.b32.xlu0 %v657, 108
      %v708 = vpop.permute.xlu0 %707
      %709 = vrot.lane.b32.xlu0 %v658, 108
      %v710 = vpop.permute.xlu0 %709
      %711 = vrot.lane.b32.xlu0 %v659, 108
      %v712 = vpop.permute.xlu0 %711
      %v713 = vsel %vm407, %v708, %v710
      %v714 = vsel %vm407, %v710, %v712
      %718 = vrot.lane.b32.xlu0 %v657, 92
      %v719 = vpop.permute.xlu0 %718
      %720 = vrot.lane.b32.xlu0 %v658, 92
      %v721 = vpop.permute.xlu0 %720
      %722 = vrot.lane.b32.xlu0 %v659, 92
      %v723 = vpop.permute.xlu0 %722
      %v724 = vsel %vm419, %v719, %v721
      %v725 = vsel %vm419, %v721, %v723
      %729 = vrot.lane.b32.xlu0 %v657, 91
      %v730 = vpop.permute.xlu0 %729
      %731 = vrot.lane.b32.xlu0 %v658, 91
      %v732 = vpop.permute.xlu0 %731
      %733 = vrot.lane.b32.xlu0 %v659, 91
      %v734 = vpop.permute.xlu0 %733
      %v735 = vsel %vm431, %v730, %v732
      %v736 = vsel %vm431, %v732, %v734
      %740 = vrot.lane.b32.xlu0 %v657, 90
      %v741 = vpop.permute.xlu0 %740
      %742 = vrot.lane.b32.xlu0 %v658, 90
      %v743 = vpop.permute.xlu0 %742
      %744 = vrot.lane.b32.xlu0 %v659, 90
      %v745 = vpop.permute.xlu0 %744
      %v746 = vsel %vm443, %v741, %v743
      %v747 = vsel %vm443, %v743, %v745
      %v751 = vld [vmem:[%s3] sm:$0xff]
      %v752 = vld [vmem:[%s4] sm:$0xff]
      %754 = vset.pattern.permute.xlu0 0
      %755 = vperm.xlu0 %754, %v752
      %v756 = vpop.permute.xlu0 %755
      %v759 = vsel %vm456, %v751, 0
      %761 = vmatprep.subr.mxu0 0.0
      %762 = vmatpush1.msra.mxu0 0.0
      %763 = vmatprep.subr.mxu0 0.0
      %764 = vmatpush1.msra.mxu0 0.0
      %765 = vmatprep.subr.mxu0 0.0
      %766 = vmatpush1.msra.mxu0 0.0
      %767 = vmatprep.subr.mxu0 0.0
      %768 = vmatpush1.msra.mxu0 0.0
      %769 = vmatprep.subr.mxu0 0.0
      %770 = vmatpush1.msra.mxu0 0.0
      %771 = vmatprep.subr.mxu0 0.0
      %772 = vmatpush1.msra.mxu0 0.0
      %773 = vmatprep.subr.mxu0 0.0
      %774 = vmatpush1.msra.mxu0 0.0
      %775 = vmatprep.subr.mxu0 %v747
      %776 = vmatpush1.msra.mxu0 %v746
      %777 = vmatprep.subr.mxu0 %v736
      %778 = vmatpush1.msra.mxu0 %v735
      %779 = vmatprep.subr.mxu0 %v725
      %780 = vmatpush1.msra.mxu0 %v724
      %781 = vmatprep.subr.mxu0 %v714
      %782 = vmatpush1.msra.mxu0 %v713
      %783 = vmatprep.subr.mxu0 %v703
      %784 = vmatpush1.msra.mxu0 %v702
      %785 = vmatprep.subr.mxu0 %v692
      %786 = vmatpush1.msra.mxu0 %v691
      %787 = vmatprep.subr.mxu0 %v681
      %788 = vmatpush1.msra.mxu0 %v680
      %789 = vmatprep.subr.mxu0 %v670
      %790 = vmatpush1.msra.mxu0 %v669
      %791 = vmatprep.subr.mxu0 %v658
      %792 = vmatpush1.msra.mxu0 %v657
      %793 = vmatprep.subr.mxu0 0.0
      %794 = vmatpush2.msra.mxu0 0.0
      %795 = vmatprep.subr.mxu0 0.0
      %796 = vmatpush2.msra.mxu0 0.0
      %797 = vmatprep.subr.mxu0 0.0
      %798 = vmatpush2.msra.mxu0 0.0
      %799 = vmatprep.subr.mxu0 0.0
      %800 = vmatpush2.msra.mxu0 0.0
      %801 = vmatprep.subr.mxu0 0.0
      %802 = vmatpush2.msra.mxu0 0.0
      %803 = vmatprep.subr.mxu0 0.0
      %804 = vmatpush2.msra.mxu0 0.0
      %805 = vmatprep.subr.mxu0 0.0
      %806 = vmatpush2.msra.mxu0 0.0
      %807 = vmatprep.subr.mxu0 0.0
      %808 = vmatpush2.msra.mxu0 0.0
      %809 = vmatprep.subr.mxu0 0.0
      %810 = vmatpush2.msra.mxu0 0.0
      %811 = vmatprep.subr.mxu0 0.0
      %812 = vmatpush2.msra.mxu0 0.0
      %813 = vmatprep.subr.mxu0 0.0
      %814 = vmatpush2.msra.mxu0 0.0
      %815 = vmatprep.subr.mxu0 0.0
      %816 = vmatpush2.msra.mxu0 0.0
      %817 = vmatprep.subr.mxu0 0.0
      %818 = vmatpush2.msra.mxu0 0.0
      %819 = vmatprep.subr.mxu0 0.0
      %820 = vmatpush2.msra.mxu0 0.0
      %821 = vmatprep.subr.mxu0 0.0
      %822 = vmatpush2.msra.mxu0 0.0
      %823 = vmatprep.subr.mxu0 0.0
      %824 = vmatpush2.msra.mxu0 0.0
      %825 = vmatprep.mubr.f32.mxu0 0.0
      %826 = vmatmul.mubr.f32.gmra.mxu0 %v759
      %v827 = vpop.f32.mrf.mxu0
      %v828 = vadd.f32 %v756, %v827
      %v829 = vpop.f32.mrf.mxu0
      %v830 = vadd.f32 %v756, %v829
      %831 = vdwg.mxu0
      %832 = vmatprep.subr.mxu0 0.0
      %833 = vmatpush1.msra.mxu0 0.0
      %834 = vmatprep.subr.mxu0 0.0
      %835 = vmatpush1.msra.mxu0 0.0
      %836 = vmatprep.subr.mxu0 0.0
      %837 = vmatpush1.msra.mxu0 0.0
      %838 = vmatprep.subr.mxu0 0.0
      %839 = vmatpush1.msra.mxu0 0.0
      %840 = vmatprep.subr.mxu0 0.0
      %841 = vmatpush1.msra.mxu0 0.0
      %842 = vmatprep.subr.mxu0 0.0
      %843 = vmatpush1.msra.mxu0 0.0
      %844 = vmatprep.subr.mxu0 0.0
      %845 = vmatpush1.msra.mxu0 0.0
      %846 = vmatprep.subr.mxu0 0.0
      %847 = vmatpush1.msra.mxu0 %v745
      %848 = vmatprep.subr.mxu0 0.0
      %849 = vmatpush1.msra.mxu0 %v734
      %850 = vmatprep.subr.mxu0 0.0
      %851 = vmatpush1.msra.mxu0 %v723
      %852 = vmatprep.subr.mxu0 0.0
      %853 = vmatpush1.msra.mxu0 %v712
      %854 = vmatprep.subr.mxu0 0.0
      %855 = vmatpush1.msra.mxu0 %v701
      %856 = vmatprep.subr.mxu0 0.0
      %857 = vmatpush1.msra.mxu0 %v690
      %858 = vmatprep.subr.mxu0 0.0
      %859 = vmatpush1.msra.mxu0 %v679
      %860 = vmatprep.subr.mxu0 0.0
      %861 = vmatpush1.msra.mxu0 %v668
      %862 = vmatprep.subr.mxu0 0.0
      %863 = vmatpush1.msra.mxu0 %v659
      %864 = vmatprep.subr.mxu0 0.0
      %865 = vmatpush2.msra.mxu0 0.0
      %866 = vmatprep.subr.mxu0 0.0
      %867 = vmatpush2.msra.mxu0 0.0
      %868 = vmatprep.subr.mxu0 0.0
      %869 = vmatpush2.msra.mxu0 0.0
      %870 = vmatprep.subr.mxu0 0.0
      %871 = vmatpush2.msra.mxu0 0.0
      %872 = vmatprep.subr.mxu0 0.0
      %873 = vmatpush2.msra.mxu0 0.0
      %874 = vmatprep.subr.mxu0 0.0
      %875 = vmatpush2.msra.mxu0 0.0
      %876 = vmatprep.subr.mxu0 0.0
      %877 = vmatpush2.msra.mxu0 0.0
      %878 = vmatprep.subr.mxu0 0.0
      %879 = vmatpush2.msra.mxu0 0.0
      %880 = vmatprep.subr.mxu0 0.0
      %881 = vmatpush2.msra.mxu0 0.0
      %882 = vmatprep.subr.mxu0 0.0
      %883 = vmatpush2.msra.mxu0 0.0
      %884 = vmatprep.subr.mxu0 0.0
      %885 = vmatpush2.msra.mxu0 0.0
      %886 = vmatprep.subr.mxu0 0.0
      %887 = vmatpush2.msra.mxu0 0.0
      %888 = vmatprep.subr.mxu0 0.0
      %889 = vmatpush2.msra.mxu0 0.0
      %890 = vmatprep.subr.mxu0 0.0
      %891 = vmatpush2.msra.mxu0 0.0
      %892 = vmatprep.subr.mxu0 0.0
      %893 = vmatpush2.msra.mxu0 0.0
      %894 = vmatprep.subr.mxu0 0.0
      %895 = vmatpush2.msra.mxu0 0.0
      %896 = vmatprep.mubr.f32.mxu0 0.0
      %897 = vmatmul.mubr.f32.gmra.mxu0 %v759
      %v898 = vpop.f32.mrf.mxu0
      %v899 = vadd.f32 %v756, %v898
      %v900 = vpop.f32.mrf.mxu0
      %901 = vdwg.mxu0
      %v902 = vmax.f32 %v828, 0.0
      %v903 = vmax.f32 %v830, 0.0
      %v904 = vmax.f32 %v899, 0.0
      %vm905 = vcmask 130048
      %906 = vst.msk [vmem:[%s224] sm:$0xff] %vm905, %v902
      %908 = vrot.lane.b32.xlu0 %v902, 126
      %v909 = vpop.permute.xlu0 %908
      %vm911 = vcmask 261248
      %912 = vst.msk [vmem:[%s224] sm:$0xff] %vm911, %v909
      %913 = vrot.lane.b32.xlu0 %v902, 124
      %v914 = vpop.permute.xlu0 %913
      %vm916 = vcmask 392448
      %917 = vst.msk [vmem:[%s224] sm:$0xff] %vm916, %v914
      %918 = vrot.lane.b32.xlu0 %v902, 122
      %v919 = vpop.permute.xlu0 %918
      %vm921 = vcmask 523648
      %922 = vst.msk [vmem:[%s224] sm:$0xff] %vm921, %v919
      %923 = vrot.lane.b32.xlu0 %v902, 120
      %v924 = vpop.permute.xlu0 %923
      %vm926 = vcmask 654848
      %927 = vst.msk [vmem:[%s224] sm:$0xff] %vm926, %v924
      %928 = vrot.lane.b32.xlu0 %v902, 118
      %v929 = vpop.permute.xlu0 %928
      %vm931 = vcmask 786048
      %932 = vst.msk [vmem:[%s224] sm:$0xff] %vm931, %v929
      %933 = vrot.lane.b32.xlu0 %v902, 116
      %v934 = vpop.permute.xlu0 %933
      %vm936 = vcmask 917248
      %937 = vst.msk [vmem:[%s224] sm:$0xff] %vm936, %v934
      %939 = vrot.lane.b32.xlu0 %v902, 114
      %v940 = vpop.permute.xlu0 %939
      %941 = vrot.lane.b32.xlu0 %v903, 114
      %v942 = vpop.permute.xlu0 %941
      %vm943 = vcmask 932864
      %v944 = vsel %vm943, %v940, %v942
      %vm946 = vcmask 1048448
      %947 = vst.msk [vmem:[%s224] sm:$0xff] %vm946, %v944
      %948 = vrot.lane.b32.xlu0 %v903, 112
      %v949 = vpop.permute.xlu0 %948
      %951 = vst.msk [vmem:[%s224 + $0x8] sm:$0xff] %vm905, %v949
      %952 = vrot.lane.b32.xlu0 %v903, 110
      %v953 = vpop.permute.xlu0 %952
      %955 = vst.msk [vmem:[%s224 + $0x8] sm:$0xff] %vm911, %v953
      %956 = vrot.lane.b32.xlu0 %v903, 108
      %v957 = vpop.permute.xlu0 %956
      %959 = vst.msk [vmem:[%s224 + $0x8] sm:$0xff] %vm916, %v957
      %960 = vrot.lane.b32.xlu0 %v903, 106
      %v961 = vpop.permute.xlu0 %960
      %963 = vst.msk [vmem:[%s224 + $0x8] sm:$0xff] %vm921, %v961
      %964 = vrot.lane.b32.xlu0 %v903, 104
      %v965 = vpop.permute.xlu0 %964
      %967 = vst.msk [vmem:[%s224 + $0x8] sm:$0xff] %vm926, %v965
      %968 = vrot.lane.b32.xlu0 %v903, 102
      %v969 = vpop.permute.xlu0 %968
      %971 = vst.msk [vmem:[%s224 + $0x8] sm:$0xff] %vm931, %v969
      %973 = vrot.lane.b32.xlu0 %v903, 100
      %v974 = vpop.permute.xlu0 %973
      %975 = vrot.lane.b32.xlu0 %v904, 100
      %v976 = vpop.permute.xlu0 %975
      %vm977 = vcmask 818176
      %v978 = vsel %vm977, %v974, %v976
      %980 = vst.msk [vmem:[%s224 + $0x8] sm:$0xff] %vm936, %v978
      %981 = vrot.lane.b32.xlu0 %v904, 98
      %v982 = vpop.permute.xlu0 %981
      %984 = vst.msk [vmem:[%s224 + $0x8] sm:$0xff] %vm946, %v982
      %p985 = scmp.lt.s32.totalorder %s16, 1
      %s986 = scalar_select %p985, %s16, 1
      %s987 = smul.addr %s986, 2
      %s988 = smul.addr %s987, 8
      %s989 = scalar_lea.vmem %s5, %s988
      // Predicated region
      $region41: #{conv_block_forward.1} parent=39 // pred_check
        %p990 = pneg %p144
      $region42: #{conv_block_forward.1} parent=39 // pred_check_branch
        %992 = sbr.rel (%p990) target = $region44
      $region43: #{conv_block_forward.1} parent=39 // pred_region
        _
      $region44: #{conv_block_forward.1} parent=39 // pred_fallthru
        _
    $region40: #{conv_block_forward.1} parent=5 // pred_fallthru
      _
    %p993 = scmp.le.s32.totalorder 2, %s11
    // Predicated region
    $region45: #{conv_block_forward.1} parent=5 // pred_check
      %p994 = pneg %p993
    $region46: #{conv_block_forward.1} parent=5 // pred_check_branch
      %996 = sbr.rel (%p994) target = $region48
    $region47: #{conv_block_forward.1} parent=5 // pred_region
      %s997 = ssub.s32 %s11, 2
      // Predicated region
      $region49: #{conv_block_forward.1} parent=47 // pred_check
        %p998 = pneg %p150
      $region50: #{conv_block_forward.1} parent=47 // pred_check_branch
        %1000 = sbr.rel (%p998) target = $region52
      $region51: #{conv_block_forward.1} parent=47 // pred_region
        %p1001 = scmp.lt.s32.totalorder %s17, 1
        %s1002 = scalar_select %p1001, %s17, 1
        %s1003 = smul.addr %s1002, 2
        %s1004 = smul.addr %s1003, 8
        %s1005 = scalar_lea.vmem %s5, %s1004
      $region52: #{conv_block_forward.1} parent=47 // pred_fallthru
        _
    $region48: #{conv_block_forward.1} parent=5 // pred_fallthru
      _
  $region6: #{conv_block_forward.1} parent=0 // loop_footer
    %s15 = sadd.s32 1, %s11
  $region7: #{conv_block_forward.1} parent=0 // loop_footer_branch
    %10 = sbr.rel target = $region3
  $region8: #{conv_block_forward.1} parent=0 // loop_exit
    _

</llo_original>
